<compile_context>
chip_gen: v6e
topology: v6e:2x2x1
jax: 0.10.0
libtpu: 0.0.40
codegen_flags: <defaults>
</compile_context>

<pallas_src>
import jax
import jax.numpy as jnp
from jax.experimental import pallas as pl
from jax.experimental.pallas import tpu as pltpu


_SQRT_2_OVER_PI = 0.7978845608028654
_GELU_C = 0.044715
_INV_SQRT2 = 0.7071067811865476


def _gelu_tanh(v):
  # tanh-form GELU: a single EUP transcendental per element.
  return 0.5 * v * (1.0 + jnp.tanh(_SQRT_2_OVER_PI * (v + _GELU_C * v * v * v)))


# ----------------------------------------------------------------------------
# Kernel: one (B_blk*C, HWpad) sublane-packed tile per grid step.
# ----------------------------------------------------------------------------
def make_kernel(W, k_conv, mxu_dtype):
  n_dw = len(k_conv)

  def kernel(*refs):
    x_ref = refs[0]
    w1, b1, w2, b2 = refs[1:5]
    dw_refs = refs[5:5 + 2 * n_dw]
    wp, bp, w3, b3, w4, b4 = refs[5 + 2 * n_dw:11 + 2 * n_dw]
    o_ref = refs[11 + 2 * n_dw]

    x = x_ref[...]                                    # (BC, HWp) f32
    BC, HWp = x.shape

    def conv1x1(v, w_ref, b_ref):
      # Block-diagonal-per-batch 1x1 conv on the MXU, f32 accumulation.
      return (jnp.dot(w_ref[...], v.astype(mxu_dtype),
                      preferred_element_type=jnp.float32) + b_ref[...])

    # --- ffn1 + residual -----------------------------------------------------
    h = _gelu_tanh(conv1x1(x, w1, b1))
    x = _gelu_tanh(x + conv1x1(h, w2, b2))

    # --- depthwise convolutions (groups == C) --------------------------------
    # Separable decomposition: column rolls shared across kernel rows, then one
    # row roll per kernel row.  Per-tap weight*mask planes are prebaked host
    # data (vld slot), already expressed at the pre-row-roll source position.
    for layer, k in enumerate(k_conv):
      wcm_ref = dw_refs[2 * layer]                    # (k*k, BC, HWp) f32
      db_ref = dw_refs[2 * layer + 1]                 # (BC, 1) f32
      pk = k // 2
      cols = [x if dj == pk else
              pltpu.roll(x, shift=(-(dj - pk)) % HWp, axis=1)
              for dj in range(k)]
      acc = jnp.broadcast_to(db_ref[...], (BC, HWp))
      for di in range(k):
        dh = di - pk
        inner = wcm_ref[di * k] * cols[0]
        for dj in range(1, k):
          inner = inner + wcm_ref[di * k + dj] * cols[dj]
        if dh != 0:
          inner = pltpu.roll(inner, shift=(-(dh * W)) % HWp, axis=1)
        acc = acc + inner
      x = _gelu_tanh(x + acc)

    # --- pointwise conv + residual ------------------------------------------
    x = _gelu_tanh(x + conv1x1(x, wp, bp))

    # --- ffn2 (no residual, no trailing gelu) --------------------------------
    h = _gelu_tanh(conv1x1(x, w3, b3))
    o_ref[...] = conv1x1(h, w4, b4).astype(o_ref.dtype)

  return kernel


# ----------------------------------------------------------------------------
# Host-side helpers.
# ----------------------------------------------------------------------------
def _dw_weighted_masks(dw, k, H, W, HWp, b_blk):
  """Prebake (k*k, b_blk*C, HWp) per-tap weight*boundary-mask planes.

  Plane (di, dj) is the output-position boundary mask rolled by dh*W so it is
  valid at the *source* position of the separable (column-roll -> row-roll)
  decomposition; no post-roll masking is needed in the kernel.
  """
  C = dw.shape[0]
  pk = k // 2
  HW = H * W
  pos = jnp.arange(HWp, dtype=jnp.int32)
  hh, ww = pos // W, pos % W
  valid = pos < HW                       # kill the padded spatial tail
  gates = []
  for di in range(k):
    dh = di - pk
    for dj in range(k):
      dwc = dj - pk
      m = valid
      if dh > 0:
        m = m & (hh < H - dh)
      elif dh < 0:
        m = m & (hh >= -dh)
      if dwc > 0:
        m = m & (ww < W - dwc)
      elif dwc < 0:
        m = m & (ww >= -dwc)
      gates.append(jnp.roll(m.astype(jnp.float32), dh * W))
  gates = jnp.stack(gates)                                   # (k*k, HWp)
  wt = jnp.tile(dw.astype(jnp.float32), (b_blk, 1))          # (b_blk*C, k*k)
  return wt.T[:, :, None] * gates[:, None, :]                # (k*k, BC, HWp)


def _choose_b_blk(N, C, Cout, HWp, target_bytes=1 << 20):
  """Pick a batch-per-grid-step so each x/out block is ~1 MiB (or all of N)."""
  per = (C + Cout) * HWp * 4
  want = max(1, min(N, target_bytes // per))
  for b in range(int(want), 0, -1):
    if N % b:
      continue
    # sub-batching keeps sublane dims (8,*)-aligned; b == N is always legal.
    if b == N or ((b * C) % 8 == 0 and (b * Cout) % 8 == 0):
      return b
  return N


def _const_spec(a):
  nd = a.ndim
  return pl.BlockSpec(a.shape, lambda n, _nd=nd: (0,) * _nd)


# ----------------------------------------------------------------------------
# Host wrapper (PyTorch-style NCHW in / out).
# ----------------------------------------------------------------------------
def pcblock_forward_nchw(x_nchw, params, k_conv, *,
                         mxu_dtype=jnp.bfloat16, b_blk=None):
  N, C, H, W = x_nchw.shape
  Cm = params['w1'].shape[0]
  Cout = params['w4'].shape[0]
  HW = H * W
  HWp = ((HW + 127) // 128) * 128        # lane-dense, unmasked stores
  n_dw = len(k_conv)

  if b_blk is None:
    b_blk = _choose_b_blk(N, C, Cout, HWp)
  assert N % b_blk == 0
  grid_n = N // b_blk
  BC = b_blk * C

  x_flat = x_nchw.reshape(N * C, HW)     # free: NCHW is contiguous
  if HWp != HW:
    x_flat = jnp.pad(x_flat, ((0, 0), (0, HWp - HW)))

  def bd(w):    # block-diagonal weight for the sublane-packed batch layout
    return jnp.kron(jnp.eye(b_blk, dtype=jnp.float32), w).astype(mxu_dtype)

  def bias(b):  # (b_blk*c, 1) f32
    return jnp.tile(b.astype(jnp.float32), (b_blk, 1))

  inputs = [x_flat,
            bd(params['w1']), bias(params['b1']),
            bd(params['w2']), bias(params['b2'])]
  for i, k in enumerate(k_conv):
    inputs.append(_dw_weighted_masks(params[f'dw{i}'], k, H, W, HWp, b_blk))
    inputs.append(bias(params[f'db{i}']))
  inputs += [bd(params['wp']), bias(params['bp']),
             bd(params['w3']), bias(params['b3']),
             bd(params['w4']), bias(params['b4'])]

  in_specs = [pl.BlockSpec((BC, HWp), lambda n: (n, 0))]
  in_specs += [_const_spec(a) for a in inputs[1:]]
  out_spec = pl.BlockSpec((b_blk * Cout, HWp), lambda n: (n, 0))

  # Explicit VMEM budget: double-buffered x/out blocks + resident constants.
  blk_bytes = (BC + b_blk * Cout) * HWp * 4
  const_bytes = sum(int(a.size) * a.dtype.itemsize for a in inputs[1:])
  vmem_limit = int(min(100 << 20,
                       max(32 << 20, 2 * (blk_bytes + const_bytes) + (4 << 20))))

  conv_flops = 2 * HWp * (C * Cm + Cm * C + C * C + C * Cm + Cm * Cout)
  dw_flops = sum(2 * HWp * C * k * k for k in k_conv)
  flops = int(N * (conv_flops + dw_flops))
  transcendentals = int(N * HWp * (2 * Cm + (2 + n_dw) * C))
  bytes_accessed = int(4 * N * HWp * (C + Cout) + const_bytes)

  kernel = make_kernel(W, tuple(k_conv), mxu_dtype)

  y_flat = pl.pallas_call(
      kernel,
      out_shape=jax.ShapeDtypeStruct((N * Cout, HWp), jnp.float32),
      grid_spec=pltpu.PrefetchScalarGridSpec(
          num_scalar_prefetch=0,
          grid=(grid_n,),
          in_specs=in_specs,
          out_specs=out_spec),
      compiler_params=pltpu.CompilerParams(
          dimension_semantics=("parallel",),
          vmem_limit_bytes=vmem_limit),
      cost_estimate=pl.CostEstimate(
          flops=flops, transcendentals=transcendentals,
          bytes_accessed=bytes_accessed),
  )(*inputs)

  return y_flat[:, :HW].reshape(N, Cout, H, W)


# ----------------------------------------------------------------------------
# Pure-JAX references (NCHW).
# ----------------------------------------------------------------------------
def ref_forward_matched(x, params, k_conv, mxu_dtype=jnp.bfloat16):
  """Same numerics as the kernel (tanh GELU, bf16-rounded matmul operands with
  f32 accumulation emulated via double-cast, f32 direct-form depthwise)."""
  N, C, H, W = x.shape
  gelu = _gelu_tanh

  def c1x1(v, w, b):
    wq = w.astype(mxu_dtype).astype(jnp.float32)
    vq = v.astype(mxu_dtype).astype(jnp.float32)
    return (jnp.einsum('oc,nchw->nohw', wq, vq,
                       precision=jax.lax.Precision.HIGHEST)
            + b.reshape(1, -1, 1, 1))

  def dwconv(v, dw, db, k):
    pk = k // 2
    vp = jnp.pad(v, ((0, 0), (0, 0), (pk, pk), (pk, pk)))
    acc = jnp.broadcast_to(db.reshape(1, C, 1, 1), v.shape)
    for di in range(k):
      for dj in range(k):
        acc = acc + (dw[:, di * k + dj].reshape(1, C, 1, 1)
                     * vp[:, :, di:di + H, dj:dj + W])
    return acc

  h = gelu(c1x1(x, params['w1'], params['b1']))
  x = gelu(x + c1x1(h, params['w2'], params['b2']))
  for i, k in enumerate(k_conv):
    x = gelu(x + dwconv(x, params[f'dw{i}'], params[f'db{i}'], k))
  x = gelu(x + c1x1(x, params['wp'], params['bp']))
  h = gelu(c1x1(x, params['w3'], params['b3']))
  return c1x1(h, params['w4'], params['b4'])


def ref_forward_exact(x, params, k_conv):
  """Exact-erf GELU, f32 everywhere (matches PyTorch F.gelu semantics)."""
  C = x.shape[1]

  def gelu(v):
    return 0.5 * v * (1.0 + jax.lax.erf(v * _INV_SQRT2))

  def c1x1(v, w, b):
    return (jnp.einsum('oc,nchw->nohw', w, v,
                       precision=jax.lax.Precision.HIGHEST)
            + b.reshape(1, -1, 1, 1))

  h = gelu(c1x1(x, params['w1'], params['b1']))
  x = gelu(x + c1x1(h, params['w2'], params['b2']))
  for i, k in enumerate(k_conv):
    p = k // 2
    w = params[f'dw{i}'].reshape(C, 1, k, k)
    b = params[f'db{i}'].reshape(1, C, 1, 1)
    conv = jax.lax.conv_general_dilated(
        x, w, window_strides=(1, 1), padding=[(p, p), (p, p)],
        dimension_numbers=('NCHW', 'OIHW', 'NCHW'),
        feature_group_count=C, precision=jax.lax.Precision.HIGHEST)
    x = gelu(x + conv + b)
  x = gelu(x + c1x1(x, params['wp'], params['bp']))
  h = gelu(c1x1(x, params['w3'], params['b3']))
  return c1x1(h, params['w4'], params['b4'])


# ----------------------------------------------------------------------------
# Deterministic parameter init (shapes mirror the PyTorch module's __init__).
# Conv1x1 weights (Cout, Cin); biases (Cout, 1); depthwise weights (C, k*k)
# row-major over (ky, kx); depthwise biases (C, 1).
# ----------------------------------------------------------------------------
def init_params(key, C_in, C_out, k_conv):
  Cm = int(1.5 * C_in)
  keys = iter(jax.random.split(key, 16 + 2 * len(k_conv)))

  def mat(cout, cin):
    return (jax.random.normal(next(keys), (cout, cin), jnp.float32)
            / jnp.sqrt(float(cin)))

  def vec(c):
    return jax.random.normal(next(keys), (c, 1), jnp.float32) * 0.05

  params = {}
  params['w1'], params['b1'] = mat(Cm, C_in), vec(Cm)        # ffn1[0]
  params['w2'], params['b2'] = mat(C_in, Cm), vec(C_in)      # ffn1[2]
  for i, k in enumerate(k_conv):                             # conv_list[i]
    params[f'dw{i}'] = (jax.random.normal(next(keys), (C_in, k * k),
                                          jnp.float32) / float(k))
    params[f'db{i}'] = vec(C_in)
  params['wp'], params['bp'] = mat(C_in, C_in), vec(C_in)    # pw
  params['w3'], params['b3'] = mat(Cm, C_in), vec(Cm)        # ffn2[0]
  params['w4'], params['b4'] = mat(C_out, Cm), vec(C_out)    # ffn2[2]
  return params


# ----------------------------------------------------------------------------
if __name__ == "__main__":
  key = jax.random.PRNGKey(0)
  k_x, k_p = jax.random.split(key)

  N, C_in, H, W = 2, 4, 16, 16
  C_out = 8
  k_conv = (3, 5)

  x_nchw = jax.random.normal(k_x, (N, C_in, H, W), jnp.float32)
  params = init_params(k_p, C_in, C_out, k_conv)

  # (1) Optimized default path: bf16 MXU operands, f32 accumulation.
  y = jax.block_until_ready(pcblock_forward_nchw(x_nchw, params, k_conv))
  assert y.shape == (N, C_out, H, W)
  y_m = ref_forward_matched(x_nchw, params, k_conv, jnp.bfloat16)
  err_m = float(jnp.max(jnp.abs(y - y_m)))
  assert err_m < 3e-3, f"kernel vs numerics-matched reference: {err_m}"

  # (2) Exact-parity MXU mode (f32 operands) vs exact-erf-GELU reference:
  #     only the tanh-GELU approximation remains.
  y32 = jax.block_until_ready(
      pcblock_forward_nchw(x_nchw, params, k_conv, mxu_dtype=jnp.float32))
  y_e = ref_forward_exact(x_nchw, params, k_conv)
  err_e = float(jnp.max(jnp.abs(y32 - y_e)))
  assert err_e < 5e-2, f"kernel(f32 MXU) vs exact-GELU reference: {err_e}"

  # (3) Coarse fidelity bound for the bf16 default path vs the exact module
  #     semantics (bf16 rounding + tanh GELU across ~8 stacked layers).
  err_bf = float(jnp.max(jnp.abs(y - y_e)))
  assert err_bf < 2e-1, f"bf16 path drifted unexpectedly far: {err_bf}"

  print("KERNEL_OK")
</pallas_src>

<mosaic_0001>
module attributes {stable_mosaic.version = 11 : i64} {
  func.func @kernel(%arg0: i32, %arg1: memref<8x256xf32, #tpu.memory_space<vmem>>, %arg2: memref<12x8xbf16, #tpu.memory_space<vmem>>, %arg3: memref<12x1xf32, #tpu.memory_space<vmem>>, %arg4: memref<8x12xbf16, #tpu.memory_space<vmem>>, %arg5: memref<8x1xf32, #tpu.memory_space<vmem>>, %arg6: memref<9x8x256xf32, #tpu.memory_space<vmem>>, %arg7: memref<8x1xf32, #tpu.memory_space<vmem>>, %arg8: memref<25x8x256xf32, #tpu.memory_space<vmem>>, %arg9: memref<8x1xf32, #tpu.memory_space<vmem>>, %arg10: memref<8x8xbf16, #tpu.memory_space<vmem>>, %arg11: memref<8x1xf32, #tpu.memory_space<vmem>>, %arg12: memref<12x8xbf16, #tpu.memory_space<vmem>>, %arg13: memref<12x1xf32, #tpu.memory_space<vmem>>, %arg14: memref<16x12xbf16, #tpu.memory_space<vmem>>, %arg15: memref<16x1xf32, #tpu.memory_space<vmem>>, %arg16: memref<16x256xf32, #tpu.memory_space<vmem>>) attributes {dimension_semantics = [#tpu.dimension_semantics<parallel>], iteration_bounds = array<i64: 1>, scalar_prefetch = 0 : i64, scratch_operands = 0 : i64, tpu.core_type = #tpu.core_type<tc>, window_params = [{transform_indices = @transform_0, window_bounds = array<i64: 8, 256>}, {pipeline_mode = #tpu.pipeline_mode<synchronous>, transform_indices = @transform_1, window_bounds = array<i64: 12, 8>}, {pipeline_mode = #tpu.pipeline_mode<synchronous>, transform_indices = @transform_2, window_bounds = array<i64: 12, 1>}, {pipeline_mode = #tpu.pipeline_mode<synchronous>, transform_indices = @transform_3, window_bounds = array<i64: 8, 12>}, {pipeline_mode = #tpu.pipeline_mode<synchronous>, transform_indices = @transform_4, window_bounds = array<i64: 8, 1>}, {pipeline_mode = #tpu.pipeline_mode<synchronous>, transform_indices = @transform_5, window_bounds = array<i64: 9, 8, 256>}, {pipeline_mode = #tpu.pipeline_mode<synchronous>, transform_indices = @transform_6, window_bounds = array<i64: 8, 1>}, {pipeline_mode = #tpu.pipeline_mode<synchronous>, transform_indices = @transform_7, window_bounds = array<i64: 25, 8, 256>}, {pipeline_mode = #tpu.pipeline_mode<synchronous>, transform_indices = @transform_8, window_bounds = array<i64: 8, 1>}, {pipeline_mode = #tpu.pipeline_mode<synchronous>, transform_indices = @transform_9, window_bounds = array<i64: 8, 8>}, {pipeline_mode = #tpu.pipeline_mode<synchronous>, transform_indices = @transform_10, window_bounds = array<i64: 8, 1>}, {pipeline_mode = #tpu.pipeline_mode<synchronous>, transform_indices = @transform_11, window_bounds = array<i64: 12, 8>}, {pipeline_mode = #tpu.pipeline_mode<synchronous>, transform_indices = @transform_12, window_bounds = array<i64: 12, 1>}, {pipeline_mode = #tpu.pipeline_mode<synchronous>, transform_indices = @transform_13, window_bounds = array<i64: 16, 12>}, {pipeline_mode = #tpu.pipeline_mode<synchronous>, transform_indices = @transform_14, window_bounds = array<i64: 16, 1>}, {transform_indices = @transform_15, window_bounds = array<i64: 16, 256>}]} {
    %c0 = arith.constant 0 : index
    %c0_0 = arith.constant 0 : index
    %0 = vector.load %arg1[%c0, %c0_0] : memref<8x256xf32, #tpu.memory_space<vmem>>, vector<8x256xf32>
    %c0_1 = arith.constant 0 : index
    %c0_2 = arith.constant 0 : index
    %1 = vector.load %arg2[%c0_1, %c0_2] : memref<12x8xbf16, #tpu.memory_space<vmem>>, vector<12x8xbf16>
    %2 = arith.truncf %0 : vector<8x256xf32> to vector<8x256xbf16>
    %cst = arith.constant dense<0.000000e+00> : vector<12x256xf32>
    %3 = tpu.matmul %1, %2, %cst {dimension_numbers = #tpu.dot_dimension_numbers<[1], [0], [0], [1], [0, 0, 1, 1], [], []>} : vector<12x8xbf16>, vector<8x256xbf16>, vector<12x256xf32> -> vector<12x256xf32>
    %c0_3 = arith.constant 0 : index
    %c0_4 = arith.constant 0 : index
    %4 = vector.load %arg3[%c0_3, %c0_4] : memref<12x1xf32, #tpu.memory_space<vmem>>, vector<12x1xf32>
    %5 = vector.broadcast %4 : vector<12x1xf32> to vector<12x256xf32>
    %6 = arith.addf %3, %5 : vector<12x256xf32>
    %cst_5 = arith.constant 5.000000e-01 : f32
    %7 = vector.broadcast %cst_5 : f32 to vector<12x256xf32>
    %8 = arith.mulf %7, %6 : vector<12x256xf32>
    %cst_6 = arith.constant 4.471500e-02 : f32
    %9 = vector.broadcast %cst_6 : f32 to vector<12x256xf32>
    %10 = arith.mulf %9, %6 : vector<12x256xf32>
    %11 = arith.mulf %10, %6 : vector<12x256xf32>
    %12 = arith.mulf %11, %6 : vector<12x256xf32>
    %13 = arith.addf %6, %12 : vector<12x256xf32>
    %cst_7 = arith.constant 0.797884583 : f32
    %14 = vector.broadcast %cst_7 : f32 to vector<12x256xf32>
    %15 = arith.mulf %14, %13 : vector<12x256xf32>
    %16 = math.tanh %15 : vector<12x256xf32>
    %cst_8 = arith.constant 1.000000e+00 : f32
    %17 = vector.broadcast %cst_8 : f32 to vector<12x256xf32>
    %18 = arith.addf %17, %16 : vector<12x256xf32>
    %19 = arith.mulf %8, %18 : vector<12x256xf32>
    %c0_9 = arith.constant 0 : index
    %c0_10 = arith.constant 0 : index
    %20 = vector.load %arg4[%c0_9, %c0_10] : memref<8x12xbf16, #tpu.memory_space<vmem>>, vector<8x12xbf16>
    %21 = arith.truncf %19 : vector<12x256xf32> to vector<12x256xbf16>
    %cst_11 = arith.constant dense<0.000000e+00> : vector<8x256xf32>
    %22 = tpu.matmul %20, %21, %cst_11 {dimension_numbers = #tpu.dot_dimension_numbers<[1], [0], [0], [1], [0, 0, 1, 1], [], []>} : vector<8x12xbf16>, vector<12x256xbf16>, vector<8x256xf32> -> vector<8x256xf32>
    %c0_12 = arith.constant 0 : index
    %c0_13 = arith.constant 0 : index
    %23 = vector.load %arg5[%c0_12, %c0_13] : memref<8x1xf32, #tpu.memory_space<vmem>>, vector<8x1xf32>
    %24 = vector.broadcast %23 : vector<8x1xf32> to vector<8x256xf32>
    %25 = arith.addf %22, %24 : vector<8x256xf32>
    %26 = arith.addf %0, %25 : vector<8x256xf32>
    %cst_14 = arith.constant 5.000000e-01 : f32
    %27 = vector.broadcast %cst_14 : f32 to vector<8x256xf32>
    %28 = arith.mulf %27, %26 : vector<8x256xf32>
    %cst_15 = arith.constant 4.471500e-02 : f32
    %29 = vector.broadcast %cst_15 : f32 to vector<8x256xf32>
    %30 = arith.mulf %29, %26 : vector<8x256xf32>
    %31 = arith.mulf %30, %26 : vector<8x256xf32>
    %32 = arith.mulf %31, %26 : vector<8x256xf32>
    %33 = arith.addf %26, %32 : vector<8x256xf32>
    %cst_16 = arith.constant 0.797884583 : f32
    %34 = vector.broadcast %cst_16 : f32 to vector<8x256xf32>
    %35 = arith.mulf %34, %33 : vector<8x256xf32>
    %36 = math.tanh %35 : vector<8x256xf32>
    %cst_17 = arith.constant 1.000000e+00 : f32
    %37 = vector.broadcast %cst_17 : f32 to vector<8x256xf32>
    %38 = arith.addf %37, %36 : vector<8x256xf32>
    %39 = arith.mulf %28, %38 : vector<8x256xf32>
    %c1_i32 = arith.constant 1 : i32
    %40 = tpu.dynamic_rotate %39 by %c1_i32 dim 1 : vector<8x256xf32>, i32 -> vector<8x256xf32>
    %c255_i32 = arith.constant 255 : i32
    %41 = tpu.dynamic_rotate %39 by %c255_i32 dim 1 : vector<8x256xf32>, i32 -> vector<8x256xf32>
    %c0_18 = arith.constant 0 : index
    %c0_19 = arith.constant 0 : index
    %42 = vector.load %arg7[%c0_18, %c0_19] : memref<8x1xf32, #tpu.memory_space<vmem>>, vector<8x1xf32>
    %43 = vector.shape_cast %42 : vector<8x1xf32> to vector<8x1xf32>
    %44 = vector.broadcast %43 : vector<8x1xf32> to vector<8x256xf32>
    %c0_20 = arith.constant 0 : index
    %c0_21 = arith.constant 0 : index
    %c0_22 = arith.constant 0 : index
    %45 = vector.load %arg6[%c0_20, %c0_21, %c0_22] : memref<9x8x256xf32, #tpu.memory_space<vmem>>, vector<1x8x256xf32>
    %46 = vector.shape_cast %45 : vector<1x8x256xf32> to vector<8x256xf32>
    %47 = arith.mulf %46, %40 : vector<8x256xf32>
    %c1 = arith.constant 1 : index
    %c0_23 = arith.constant 0 : index
    %c0_24 = arith.constant 0 : index
    %48 = vector.load %arg6[%c1, %c0_23, %c0_24] : memref<9x8x256xf32, #tpu.memory_space<vmem>>, vector<1x8x256xf32>
    %49 = vector.shape_cast %48 : vector<1x8x256xf32> to vector<8x256xf32>
    %50 = arith.mulf %49, %39 : vector<8x256xf32>
    %51 = arith.addf %47, %50 : vector<8x256xf32>
    %c2 = arith.constant 2 : index
    %c0_25 = arith.constant 0 : index
    %c0_26 = arith.constant 0 : index
    %52 = vector.load %arg6[%c2, %c0_25, %c0_26] : memref<9x8x256xf32, #tpu.memory_space<vmem>>, vector<1x8x256xf32>
    %53 = vector.shape_cast %52 : vector<1x8x256xf32> to vector<8x256xf32>
    %54 = arith.mulf %53, %41 : vector<8x256xf32>
    %55 = arith.addf %51, %54 : vector<8x256xf32>
    %c16_i32 = arith.constant 16 : i32
    %56 = tpu.dynamic_rotate %55 by %c16_i32 dim 1 : vector<8x256xf32>, i32 -> vector<8x256xf32>
    %57 = arith.addf %44, %56 : vector<8x256xf32>
    %c3 = arith.constant 3 : index
    %c0_27 = arith.constant 0 : index
    %c0_28 = arith.constant 0 : index
    %58 = vector.load %arg6[%c3, %c0_27, %c0_28] : memref<9x8x256xf32, #tpu.memory_space<vmem>>, vector<1x8x256xf32>
    %59 = vector.shape_cast %58 : vector<1x8x256xf32> to vector<8x256xf32>
    %60 = arith.mulf %59, %40 : vector<8x256xf32>
    %c4 = arith.constant 4 : index
    %c0_29 = arith.constant 0 : index
    %c0_30 = arith.constant 0 : index
    %61 = vector.load %arg6[%c4, %c0_29, %c0_30] : memref<9x8x256xf32, #tpu.memory_space<vmem>>, vector<1x8x256xf32>
    %62 = vector.shape_cast %61 : vector<1x8x256xf32> to vector<8x256xf32>
    %63 = arith.mulf %62, %39 : vector<8x256xf32>
    %64 = arith.addf %60, %63 : vector<8x256xf32>
    %c5 = arith.constant 5 : index
    %c0_31 = arith.constant 0 : index
    %c0_32 = arith.constant 0 : index
    %65 = vector.load %arg6[%c5, %c0_31, %c0_32] : memref<9x8x256xf32, #tpu.memory_space<vmem>>, vector<1x8x256xf32>
    %66 = vector.shape_cast %65 : vector<1x8x256xf32> to vector<8x256xf32>
    %67 = arith.mulf %66, %41 : vector<8x256xf32>
    %68 = arith.addf %64, %67 : vector<8x256xf32>
    %69 = arith.addf %57, %68 : vector<8x256xf32>
    %c6 = arith.constant 6 : index
    %c0_33 = arith.constant 0 : index
    %c0_34 = arith.constant 0 : index
    %70 = vector.load %arg6[%c6, %c0_33, %c0_34] : memref<9x8x256xf32, #tpu.memory_space<vmem>>, vector<1x8x256xf32>
    %71 = vector.shape_cast %70 : vector<1x8x256xf32> to vector<8x256xf32>
    %72 = arith.mulf %71, %40 : vector<8x256xf32>
    %c7 = arith.constant 7 : index
    %c0_35 = arith.constant 0 : index
    %c0_36 = arith.constant 0 : index
    %73 = vector.load %arg6[%c7, %c0_35, %c0_36] : memref<9x8x256xf32, #tpu.memory_space<vmem>>, vector<1x8x256xf32>
    %74 = vector.shape_cast %73 : vector<1x8x256xf32> to vector<8x256xf32>
    %75 = arith.mulf %74, %39 : vector<8x256xf32>
    %76 = arith.addf %72, %75 : vector<8x256xf32>
    %c8 = arith.constant 8 : index
    %c0_37 = arith.constant 0 : index
    %c0_38 = arith.constant 0 : index
    %77 = vector.load %arg6[%c8, %c0_37, %c0_38] : memref<9x8x256xf32, #tpu.memory_space<vmem>>, vector<1x8x256xf32>
    %78 = vector.shape_cast %77 : vector<1x8x256xf32> to vector<8x256xf32>
    %79 = arith.mulf %78, %41 : vector<8x256xf32>
    %80 = arith.addf %76, %79 : vector<8x256xf32>
    %c240_i32 = arith.constant 240 : i32
    %81 = tpu.dynamic_rotate %80 by %c240_i32 dim 1 : vector<8x256xf32>, i32 -> vector<8x256xf32>
    %82 = arith.addf %69, %81 : vector<8x256xf32>
    %83 = arith.addf %39, %82 : vector<8x256xf32>
    %cst_39 = arith.constant 5.000000e-01 : f32
    %84 = vector.broadcast %cst_39 : f32 to vector<8x256xf32>
    %85 = arith.mulf %84, %83 : vector<8x256xf32>
    %cst_40 = arith.constant 4.471500e-02 : f32
    %86 = vector.broadcast %cst_40 : f32 to vector<8x256xf32>
    %87 = arith.mulf %86, %83 : vector<8x256xf32>
    %88 = arith.mulf %87, %83 : vector<8x256xf32>
    %89 = arith.mulf %88, %83 : vector<8x256xf32>
    %90 = arith.addf %83, %89 : vector<8x256xf32>
    %cst_41 = arith.constant 0.797884583 : f32
    %91 = vector.broadcast %cst_41 : f32 to vector<8x256xf32>
    %92 = arith.mulf %91, %90 : vector<8x256xf32>
    %93 = math.tanh %92 : vector<8x256xf32>
    %cst_42 = arith.constant 1.000000e+00 : f32
    %94 = vector.broadcast %cst_42 : f32 to vector<8x256xf32>
    %95 = arith.addf %94, %93 : vector<8x256xf32>
    %96 = arith.mulf %85, %95 : vector<8x256xf32>
    %c2_i32 = arith.constant 2 : i32
    %97 = tpu.dynamic_rotate %96 by %c2_i32 dim 1 : vector<8x256xf32>, i32 -> vector<8x256xf32>
    %c1_i32_43 = arith.constant 1 : i32
    %98 = tpu.dynamic_rotate %96 by %c1_i32_43 dim 1 : vector<8x256xf32>, i32 -> vector<8x256xf32>
    %c255_i32_44 = arith.constant 255 : i32
    %99 = tpu.dynamic_rotate %96 by %c255_i32_44 dim 1 : vector<8x256xf32>, i32 -> vector<8x256xf32>
    %c254_i32 = arith.constant 254 : i32
    %100 = tpu.dynamic_rotate %96 by %c254_i32 dim 1 : vector<8x256xf32>, i32 -> vector<8x256xf32>
    %c0_45 = arith.constant 0 : index
    %c0_46 = arith.constant 0 : index
    %101 = vector.load %arg9[%c0_45, %c0_46] : memref<8x1xf32, #tpu.memory_space<vmem>>, vector<8x1xf32>
    %102 = vector.shape_cast %101 : vector<8x1xf32> to vector<8x1xf32>
    %103 = vector.broadcast %102 : vector<8x1xf32> to vector<8x256xf32>
    %c0_47 = arith.constant 0 : index
    %c0_48 = arith.constant 0 : index
    %c0_49 = arith.constant 0 : index
    %104 = vector.load %arg8[%c0_47, %c0_48, %c0_49] : memref<25x8x256xf32, #tpu.memory_space<vmem>>, vector<1x8x256xf32>
    %105 = vector.shape_cast %104 : vector<1x8x256xf32> to vector<8x256xf32>
    %106 = arith.mulf %105, %97 : vector<8x256xf32>
    %c1_50 = arith.constant 1 : index
    %c0_51 = arith.constant 0 : index
    %c0_52 = arith.constant 0 : index
    %107 = vector.load %arg8[%c1_50, %c0_51, %c0_52] : memref<25x8x256xf32, #tpu.memory_space<vmem>>, vector<1x8x256xf32>
    %108 = vector.shape_cast %107 : vector<1x8x256xf32> to vector<8x256xf32>
    %109 = arith.mulf %108, %98 : vector<8x256xf32>
    %110 = arith.addf %106, %109 : vector<8x256xf32>
    %c2_53 = arith.constant 2 : index
    %c0_54 = arith.constant 0 : index
    %c0_55 = arith.constant 0 : index
    %111 = vector.load %arg8[%c2_53, %c0_54, %c0_55] : memref<25x8x256xf32, #tpu.memory_space<vmem>>, vector<1x8x256xf32>
    %112 = vector.shape_cast %111 : vector<1x8x256xf32> to vector<8x256xf32>
    %113 = arith.mulf %112, %96 : vector<8x256xf32>
    %114 = arith.addf %110, %113 : vector<8x256xf32>
    %c3_56 = arith.constant 3 : index
    %c0_57 = arith.constant 0 : index
    %c0_58 = arith.constant 0 : index
    %115 = vector.load %arg8[%c3_56, %c0_57, %c0_58] : memref<25x8x256xf32, #tpu.memory_space<vmem>>, vector<1x8x256xf32>
    %116 = vector.shape_cast %115 : vector<1x8x256xf32> to vector<8x256xf32>
    %117 = arith.mulf %116, %99 : vector<8x256xf32>
    %118 = arith.addf %114, %117 : vector<8x256xf32>
    %c4_59 = arith.constant 4 : index
    %c0_60 = arith.constant 0 : index
    %c0_61 = arith.constant 0 : index
    %119 = vector.load %arg8[%c4_59, %c0_60, %c0_61] : memref<25x8x256xf32, #tpu.memory_space<vmem>>, vector<1x8x256xf32>
    %120 = vector.shape_cast %119 : vector<1x8x256xf32> to vector<8x256xf32>
    %121 = arith.mulf %120, %100 : vector<8x256xf32>
    %122 = arith.addf %118, %121 : vector<8x256xf32>
    %c32_i32 = arith.constant 32 : i32
    %123 = tpu.dynamic_rotate %122 by %c32_i32 dim 1 : vector<8x256xf32>, i32 -> vector<8x256xf32>
    %124 = arith.addf %103, %123 : vector<8x256xf32>
    %c5_62 = arith.constant 5 : index
    %c0_63 = arith.constant 0 : index
    %c0_64 = arith.constant 0 : index
    %125 = vector.load %arg8[%c5_62, %c0_63, %c0_64] : memref<25x8x256xf32, #tpu.memory_space<vmem>>, vector<1x8x256xf32>
    %126 = vector.shape_cast %125 : vector<1x8x256xf32> to vector<8x256xf32>
    %127 = arith.mulf %126, %97 : vector<8x256xf32>
    %c6_65 = arith.constant 6 : index
    %c0_66 = arith.constant 0 : index
    %c0_67 = arith.constant 0 : index
    %128 = vector.load %arg8[%c6_65, %c0_66, %c0_67] : memref<25x8x256xf32, #tpu.memory_space<vmem>>, vector<1x8x256xf32>
    %129 = vector.shape_cast %128 : vector<1x8x256xf32> to vector<8x256xf32>
    %130 = arith.mulf %129, %98 : vector<8x256xf32>
    %131 = arith.addf %127, %130 : vector<8x256xf32>
    %c7_68 = arith.constant 7 : index
    %c0_69 = arith.constant 0 : index
    %c0_70 = arith.constant 0 : index
    %132 = vector.load %arg8[%c7_68, %c0_69, %c0_70] : memref<25x8x256xf32, #tpu.memory_space<vmem>>, vector<1x8x256xf32>
    %133 = vector.shape_cast %132 : vector<1x8x256xf32> to vector<8x256xf32>
    %134 = arith.mulf %133, %96 : vector<8x256xf32>
    %135 = arith.addf %131, %134 : vector<8x256xf32>
    %c8_71 = arith.constant 8 : index
    %c0_72 = arith.constant 0 : index
    %c0_73 = arith.constant 0 : index
    %136 = vector.load %arg8[%c8_71, %c0_72, %c0_73] : memref<25x8x256xf32, #tpu.memory_space<vmem>>, vector<1x8x256xf32>
    %137 = vector.shape_cast %136 : vector<1x8x256xf32> to vector<8x256xf32>
    %138 = arith.mulf %137, %99 : vector<8x256xf32>
    %139 = arith.addf %135, %138 : vector<8x256xf32>
    %c9 = arith.constant 9 : index
    %c0_74 = arith.constant 0 : index
    %c0_75 = arith.constant 0 : index
    %140 = vector.load %arg8[%c9, %c0_74, %c0_75] : memref<25x8x256xf32, #tpu.memory_space<vmem>>, vector<1x8x256xf32>
    %141 = vector.shape_cast %140 : vector<1x8x256xf32> to vector<8x256xf32>
    %142 = arith.mulf %141, %100 : vector<8x256xf32>
    %143 = arith.addf %139, %142 : vector<8x256xf32>
    %c16_i32_76 = arith.constant 16 : i32
    %144 = tpu.dynamic_rotate %143 by %c16_i32_76 dim 1 : vector<8x256xf32>, i32 -> vector<8x256xf32>
    %145 = arith.addf %124, %144 : vector<8x256xf32>
    %c10 = arith.constant 10 : index
    %c0_77 = arith.constant 0 : index
    %c0_78 = arith.constant 0 : index
    %146 = vector.load %arg8[%c10, %c0_77, %c0_78] : memref<25x8x256xf32, #tpu.memory_space<vmem>>, vector<1x8x256xf32>
    %147 = vector.shape_cast %146 : vector<1x8x256xf32> to vector<8x256xf32>
    %148 = arith.mulf %147, %97 : vector<8x256xf32>
    %c11 = arith.constant 11 : index
    %c0_79 = arith.constant 0 : index
    %c0_80 = arith.constant 0 : index
    %149 = vector.load %arg8[%c11, %c0_79, %c0_80] : memref<25x8x256xf32, #tpu.memory_space<vmem>>, vector<1x8x256xf32>
    %150 = vector.shape_cast %149 : vector<1x8x256xf32> to vector<8x256xf32>
    %151 = arith.mulf %150, %98 : vector<8x256xf32>
    %152 = arith.addf %148, %151 : vector<8x256xf32>
    %c12 = arith.constant 12 : index
    %c0_81 = arith.constant 0 : index
    %c0_82 = arith.constant 0 : index
    %153 = vector.load %arg8[%c12, %c0_81, %c0_82] : memref<25x8x256xf32, #tpu.memory_space<vmem>>, vector<1x8x256xf32>
    %154 = vector.shape_cast %153 : vector<1x8x256xf32> to vector<8x256xf32>
    %155 = arith.mulf %154, %96 : vector<8x256xf32>
    %156 = arith.addf %152, %155 : vector<8x256xf32>
    %c13 = arith.constant 13 : index
    %c0_83 = arith.constant 0 : index
    %c0_84 = arith.constant 0 : index
    %157 = vector.load %arg8[%c13, %c0_83, %c0_84] : memref<25x8x256xf32, #tpu.memory_space<vmem>>, vector<1x8x256xf32>
    %158 = vector.shape_cast %157 : vector<1x8x256xf32> to vector<8x256xf32>
    %159 = arith.mulf %158, %99 : vector<8x256xf32>
    %160 = arith.addf %156, %159 : vector<8x256xf32>
    %c14 = arith.constant 14 : index
    %c0_85 = arith.constant 0 : index
    %c0_86 = arith.constant 0 : index
    %161 = vector.load %arg8[%c14, %c0_85, %c0_86] : memref<25x8x256xf32, #tpu.memory_space<vmem>>, vector<1x8x256xf32>
    %162 = vector.shape_cast %161 : vector<1x8x256xf32> to vector<8x256xf32>
    %163 = arith.mulf %162, %100 : vector<8x256xf32>
    %164 = arith.addf %160, %163 : vector<8x256xf32>
    %165 = arith.addf %145, %164 : vector<8x256xf32>
    %c15 = arith.constant 15 : index
    %c0_87 = arith.constant 0 : index
    %c0_88 = arith.constant 0 : index
    %166 = vector.load %arg8[%c15, %c0_87, %c0_88] : memref<25x8x256xf32, #tpu.memory_space<vmem>>, vector<1x8x256xf32>
    %167 = vector.shape_cast %166 : vector<1x8x256xf32> to vector<8x256xf32>
    %168 = arith.mulf %167, %97 : vector<8x256xf32>
    %c16 = arith.constant 16 : index
    %c0_89 = arith.constant 0 : index
    %c0_90 = arith.constant 0 : index
    %169 = vector.load %arg8[%c16, %c0_89, %c0_90] : memref<25x8x256xf32, #tpu.memory_space<vmem>>, vector<1x8x256xf32>
    %170 = vector.shape_cast %169 : vector<1x8x256xf32> to vector<8x256xf32>
    %171 = arith.mulf %170, %98 : vector<8x256xf32>
    %172 = arith.addf %168, %171 : vector<8x256xf32>
    %c17 = arith.constant 17 : index
    %c0_91 = arith.constant 0 : index
    %c0_92 = arith.constant 0 : index
    %173 = vector.load %arg8[%c17, %c0_91, %c0_92] : memref<25x8x256xf32, #tpu.memory_space<vmem>>, vector<1x8x256xf32>
    %174 = vector.shape_cast %173 : vector<1x8x256xf32> to vector<8x256xf32>
    %175 = arith.mulf %174, %96 : vector<8x256xf32>
    %176 = arith.addf %172, %175 : vector<8x256xf32>
    %c18 = arith.constant 18 : index
    %c0_93 = arith.constant 0 : index
    %c0_94 = arith.constant 0 : index
    %177 = vector.load %arg8[%c18, %c0_93, %c0_94] : memref<25x8x256xf32, #tpu.memory_space<vmem>>, vector<1x8x256xf32>
    %178 = vector.shape_cast %177 : vector<1x8x256xf32> to vector<8x256xf32>
    %179 = arith.mulf %178, %99 : vector<8x256xf32>
    %180 = arith.addf %176, %179 : vector<8x256xf32>
    %c19 = arith.constant 19 : index
    %c0_95 = arith.constant 0 : index
    %c0_96 = arith.constant 0 : index
    %181 = vector.load %arg8[%c19, %c0_95, %c0_96] : memref<25x8x256xf32, #tpu.memory_space<vmem>>, vector<1x8x256xf32>
    %182 = vector.shape_cast %181 : vector<1x8x256xf32> to vector<8x256xf32>
    %183 = arith.mulf %182, %100 : vector<8x256xf32>
    %184 = arith.addf %180, %183 : vector<8x256xf32>
    %c240_i32_97 = arith.constant 240 : i32
    %185 = tpu.dynamic_rotate %184 by %c240_i32_97 dim 1 : vector<8x256xf32>, i32 -> vector<8x256xf32>
    %186 = arith.addf %165, %185 : vector<8x256xf32>
    %c20 = arith.constant 20 : index
    %c0_98 = arith.constant 0 : index
    %c0_99 = arith.constant 0 : index
    %187 = vector.load %arg8[%c20, %c0_98, %c0_99] : memref<25x8x256xf32, #tpu.memory_space<vmem>>, vector<1x8x256xf32>
    %188 = vector.shape_cast %187 : vector<1x8x256xf32> to vector<8x256xf32>
    %189 = arith.mulf %188, %97 : vector<8x256xf32>
    %c21 = arith.constant 21 : index
    %c0_100 = arith.constant 0 : index
    %c0_101 = arith.constant 0 : index
    %190 = vector.load %arg8[%c21, %c0_100, %c0_101] : memref<25x8x256xf32, #tpu.memory_space<vmem>>, vector<1x8x256xf32>
    %191 = vector.shape_cast %190 : vector<1x8x256xf32> to vector<8x256xf32>
    %192 = arith.mulf %191, %98 : vector<8x256xf32>
    %193 = arith.addf %189, %192 : vector<8x256xf32>
    %c22 = arith.constant 22 : index
    %c0_102 = arith.constant 0 : index
    %c0_103 = arith.constant 0 : index
    %194 = vector.load %arg8[%c22, %c0_102, %c0_103] : memref<25x8x256xf32, #tpu.memory_space<vmem>>, vector<1x8x256xf32>
    %195 = vector.shape_cast %194 : vector<1x8x256xf32> to vector<8x256xf32>
    %196 = arith.mulf %195, %96 : vector<8x256xf32>
    %197 = arith.addf %193, %196 : vector<8x256xf32>
    %c23 = arith.constant 23 : index
    %c0_104 = arith.constant 0 : index
    %c0_105 = arith.constant 0 : index
    %198 = vector.load %arg8[%c23, %c0_104, %c0_105] : memref<25x8x256xf32, #tpu.memory_space<vmem>>, vector<1x8x256xf32>
    %199 = vector.shape_cast %198 : vector<1x8x256xf32> to vector<8x256xf32>
    %200 = arith.mulf %199, %99 : vector<8x256xf32>
    %201 = arith.addf %197, %200 : vector<8x256xf32>
    %c24 = arith.constant 24 : index
    %c0_106 = arith.constant 0 : index
    %c0_107 = arith.constant 0 : index
    %202 = vector.load %arg8[%c24, %c0_106, %c0_107] : memref<25x8x256xf32, #tpu.memory_space<vmem>>, vector<1x8x256xf32>
    %203 = vector.shape_cast %202 : vector<1x8x256xf32> to vector<8x256xf32>
    %204 = arith.mulf %203, %100 : vector<8x256xf32>
    %205 = arith.addf %201, %204 : vector<8x256xf32>
    %c224_i32 = arith.constant 224 : i32
    %206 = tpu.dynamic_rotate %205 by %c224_i32 dim 1 : vector<8x256xf32>, i32 -> vector<8x256xf32>
    %207 = arith.addf %186, %206 : vector<8x256xf32>
    %208 = arith.addf %96, %207 : vector<8x256xf32>
    %cst_108 = arith.constant 5.000000e-01 : f32
    %209 = vector.broadcast %cst_108 : f32 to vector<8x256xf32>
    %210 = arith.mulf %209, %208 : vector<8x256xf32>
    %cst_109 = arith.constant 4.471500e-02 : f32
    %211 = vector.broadcast %cst_109 : f32 to vector<8x256xf32>
    %212 = arith.mulf %211, %208 : vector<8x256xf32>
    %213 = arith.mulf %212, %208 : vector<8x256xf32>
    %214 = arith.mulf %213, %208 : vector<8x256xf32>
    %215 = arith.addf %208, %214 : vector<8x256xf32>
    %cst_110 = arith.constant 0.797884583 : f32
    %216 = vector.broadcast %cst_110 : f32 to vector<8x256xf32>
    %217 = arith.mulf %216, %215 : vector<8x256xf32>
    %218 = math.tanh %217 : vector<8x256xf32>
    %cst_111 = arith.constant 1.000000e+00 : f32
    %219 = vector.broadcast %cst_111 : f32 to vector<8x256xf32>
    %220 = arith.addf %219, %218 : vector<8x256xf32>
    %221 = arith.mulf %210, %220 : vector<8x256xf32>
    %c0_112 = arith.constant 0 : index
    %c0_113 = arith.constant 0 : index
    %222 = vector.load %arg10[%c0_112, %c0_113] : memref<8x8xbf16, #tpu.memory_space<vmem>>, vector<8x8xbf16>
    %223 = arith.truncf %221 : vector<8x256xf32> to vector<8x256xbf16>
    %cst_114 = arith.constant dense<0.000000e+00> : vector<8x256xf32>
    %224 = tpu.matmul %222, %223, %cst_114 {dimension_numbers = #tpu.dot_dimension_numbers<[1], [0], [0], [1], [0, 0, 1, 1], [], []>} : vector<8x8xbf16>, vector<8x256xbf16>, vector<8x256xf32> -> vector<8x256xf32>
    %c0_115 = arith.constant 0 : index
    %c0_116 = arith.constant 0 : index
    %225 = vector.load %arg11[%c0_115, %c0_116] : memref<8x1xf32, #tpu.memory_space<vmem>>, vector<8x1xf32>
    %226 = vector.broadcast %225 : vector<8x1xf32> to vector<8x256xf32>
    %227 = arith.addf %224, %226 : vector<8x256xf32>
    %228 = arith.addf %221, %227 : vector<8x256xf32>
    %cst_117 = arith.constant 5.000000e-01 : f32
    %229 = vector.broadcast %cst_117 : f32 to vector<8x256xf32>
    %230 = arith.mulf %229, %228 : vector<8x256xf32>
    %cst_118 = arith.constant 4.471500e-02 : f32
    %231 = vector.broadcast %cst_118 : f32 to vector<8x256xf32>
    %232 = arith.mulf %231, %228 : vector<8x256xf32>
    %233 = arith.mulf %232, %228 : vector<8x256xf32>
    %234 = arith.mulf %233, %228 : vector<8x256xf32>
    %235 = arith.addf %228, %234 : vector<8x256xf32>
    %cst_119 = arith.constant 0.797884583 : f32
    %236 = vector.broadcast %cst_119 : f32 to vector<8x256xf32>
    %237 = arith.mulf %236, %235 : vector<8x256xf32>
    %238 = math.tanh %237 : vector<8x256xf32>
    %cst_120 = arith.constant 1.000000e+00 : f32
    %239 = vector.broadcast %cst_120 : f32 to vector<8x256xf32>
    %240 = arith.addf %239, %238 : vector<8x256xf32>
    %241 = arith.mulf %230, %240 : vector<8x256xf32>
    %c0_121 = arith.constant 0 : index
    %c0_122 = arith.constant 0 : index
    %242 = vector.load %arg12[%c0_121, %c0_122] : memref<12x8xbf16, #tpu.memory_space<vmem>>, vector<12x8xbf16>
    %243 = arith.truncf %241 : vector<8x256xf32> to vector<8x256xbf16>
    %cst_123 = arith.constant dense<0.000000e+00> : vector<12x256xf32>
    %244 = tpu.matmul %242, %243, %cst_123 {dimension_numbers = #tpu.dot_dimension_numbers<[1], [0], [0], [1], [0, 0, 1, 1], [], []>} : vector<12x8xbf16>, vector<8x256xbf16>, vector<12x256xf32> -> vector<12x256xf32>
    %c0_124 = arith.constant 0 : index
    %c0_125 = arith.constant 0 : index
    %245 = vector.load %arg13[%c0_124, %c0_125] : memref<12x1xf32, #tpu.memory_space<vmem>>, vector<12x1xf32>
    %246 = vector.broadcast %245 : vector<12x1xf32> to vector<12x256xf32>
    %247 = arith.addf %244, %246 : vector<12x256xf32>
    %cst_126 = arith.constant 5.000000e-01 : f32
    %248 = vector.broadcast %cst_126 : f32 to vector<12x256xf32>
    %249 = arith.mulf %248, %247 : vector<12x256xf32>
    %cst_127 = arith.constant 4.471500e-02 : f32
    %250 = vector.broadcast %cst_127 : f32 to vector<12x256xf32>
    %251 = arith.mulf %250, %247 : vector<12x256xf32>
    %252 = arith.mulf %251, %247 : vector<12x256xf32>
    %253 = arith.mulf %252, %247 : vector<12x256xf32>
    %254 = arith.addf %247, %253 : vector<12x256xf32>
    %cst_128 = arith.constant 0.797884583 : f32
    %255 = vector.broadcast %cst_128 : f32 to vector<12x256xf32>
    %256 = arith.mulf %255, %254 : vector<12x256xf32>
    %257 = math.tanh %256 : vector<12x256xf32>
    %cst_129 = arith.constant 1.000000e+00 : f32
    %258 = vector.broadcast %cst_129 : f32 to vector<12x256xf32>
    %259 = arith.addf %258, %257 : vector<12x256xf32>
    %260 = arith.mulf %249, %259 : vector<12x256xf32>
    %c0_130 = arith.constant 0 : index
    %c0_131 = arith.constant 0 : index
    %261 = vector.load %arg14[%c0_130, %c0_131] : memref<16x12xbf16, #tpu.memory_space<vmem>>, vector<16x12xbf16>
    %262 = arith.truncf %260 : vector<12x256xf32> to vector<12x256xbf16>
    %cst_132 = arith.constant dense<0.000000e+00> : vector<16x256xf32>
    %263 = tpu.matmul %261, %262, %cst_132 {dimension_numbers = #tpu.dot_dimension_numbers<[1], [0], [0], [1], [0, 0, 1, 1], [], []>} : vector<16x12xbf16>, vector<12x256xbf16>, vector<16x256xf32> -> vector<16x256xf32>
    %c0_133 = arith.constant 0 : index
    %c0_134 = arith.constant 0 : index
    %264 = vector.load %arg15[%c0_133, %c0_134] : memref<16x1xf32, #tpu.memory_space<vmem>>, vector<16x1xf32>
    %265 = vector.broadcast %264 : vector<16x1xf32> to vector<16x256xf32>
    %266 = arith.addf %263, %265 : vector<16x256xf32>
    %c0_135 = arith.constant 0 : index
    %c0_136 = arith.constant 0 : index
    %267 = vector.load %arg16[%c0_135, %c0_136] : memref<16x256xf32, #tpu.memory_space<vmem>>, vector<16x256xf32>
    tpu.vector_store %arg16[%c0_135, %c0_136], %266 {strides = array<i32>} : memref<16x256xf32, #tpu.memory_space<vmem>>, vector<16x256xf32>,
    return
  }
  func.func @transform_0(%arg0: i32) -> (i32, i32) {
    %c0_i32 = arith.constant 0 : i32
    %c0_i32_0 = arith.constant 0 : i32
    return %arg0, %c0_i32 : i32, i32
  }
  func.func @transform_1(%arg0: i32) -> (i32, i32) {
    %c0_i32 = arith.constant 0 : i32
    %c0_i32_0 = arith.constant 0 : i32
    %c0_i32_1 = arith.constant 0 : i32
    return %c0_i32, %c0_i32_0 : i32, i32
  }
  func.func @transform_2(%arg0: i32) -> (i32, i32) {
    %c0_i32 = arith.constant 0 : i32
    %c0_i32_0 = arith.constant 0 : i32
    %c0_i32_1 = arith.constant 0 : i32
    return %c0_i32, %c0_i32_0 : i32, i32
  }
  func.func @transform_3(%arg0: i32) -> (i32, i32) {
    %c0_i32 = arith.constant 0 : i32
    %c0_i32_0 = arith.constant 0 : i32
    %c0_i32_1 = arith.constant 0 : i32
    return %c0_i32, %c0_i32_0 : i32, i32
  }
  func.func @transform_4(%arg0: i32) -> (i32, i32) {
    %c0_i32 = arith.constant 0 : i32
    %c0_i32_0 = arith.constant 0 : i32
    %c0_i32_1 = arith.constant 0 : i32
    return %c0_i32, %c0_i32_0 : i32, i32
  }
  func.func @transform_5(%arg0: i32) -> (i32, i32, i32) {
    %c0_i32 = arith.constant 0 : i32
    %c0_i32_0 = arith.constant 0 : i32
    %c0_i32_1 = arith.constant 0 : i32
    %c0_i32_2 = arith.constant 0 : i32
    return %c0_i32, %c0_i32_0, %c0_i32_1 : i32, i32, i32
  }
  func.func @transform_6(%arg0: i32) -> (i32, i32) {
    %c0_i32 = arith.constant 0 : i32
    %c0_i32_0 = arith.constant 0 : i32
    %c0_i32_1 = arith.constant 0 : i32
    return %c0_i32, %c0_i32_0 : i32, i32
  }
  func.func @transform_7(%arg0: i32) -> (i32, i32, i32) {
    %c0_i32 = arith.constant 0 : i32
    %c0_i32_0 = arith.constant 0 : i32
    %c0_i32_1 = arith.constant 0 : i32
    %c0_i32_2 = arith.constant 0 : i32
    return %c0_i32, %c0_i32_0, %c0_i32_1 : i32, i32, i32
  }
  func.func @transform_8(%arg0: i32) -> (i32, i32) {
    %c0_i32 = arith.constant 0 : i32
    %c0_i32_0 = arith.constant 0 : i32
    %c0_i32_1 = arith.constant 0 : i32
    return %c0_i32, %c0_i32_0 : i32, i32
  }
  func.func @transform_9(%arg0: i32) -> (i32, i32) {
    %c0_i32 = arith.constant 0 : i32
    %c0_i32_0 = arith.constant 0 : i32
    %c0_i32_1 = arith.constant 0 : i32
    return %c0_i32, %c0_i32_0 : i32, i32
  }
  func.func @transform_10(%arg0: i32) -> (i32, i32) {
    %c0_i32 = arith.constant 0 : i32
    %c0_i32_0 = arith.constant 0 : i32
    %c0_i32_1 = arith.constant 0 : i32
    return %c0_i32, %c0_i32_0 : i32, i32
  }
  func.func @transform_11(%arg0: i32) -> (i32, i32) {
    %c0_i32 = arith.constant 0 : i32
    %c0_i32_0 = arith.constant 0 : i32
    %c0_i32_1 = arith.constant 0 : i32
    return %c0_i32, %c0_i32_0 : i32, i32
  }
  func.func @transform_12(%arg0: i32) -> (i32, i32) {
    %c0_i32 = arith.constant 0 : i32
    %c0_i32_0 = arith.constant 0 : i32
    %c0_i32_1 = arith.constant 0 : i32
    return %c0_i32, %c0_i32_0 : i32, i32
  }
  func.func @transform_13(%arg0: i32) -> (i32, i32) {
    %c0_i32 = arith.constant 0 : i32
    %c0_i32_0 = arith.constant 0 : i32
    %c0_i32_1 = arith.constant 0 : i32
    return %c0_i32, %c0_i32_0 : i32, i32
  }
  func.func @transform_14(%arg0: i32) -> (i32, i32) {
    %c0_i32 = arith.constant 0 : i32
    %c0_i32_0 = arith.constant 0 : i32
    %c0_i32_1 = arith.constant 0 : i32
    return %c0_i32, %c0_i32_0 : i32, i32
  }
  func.func @transform_15(%arg0: i32) -> (i32, i32) {
    %c0_i32 = arith.constant 0 : i32
    %c0_i32_0 = arith.constant 0 : i32
    return %arg0, %c0_i32 : i32, i32
  }
}

</mosaic_0001>

<llo_original>
// kernel: tpu_custom_call.1
$region0: #{tpu_custom_call.1}
  #allocation0 [shape = 'u32[]', space=smem, size = 0x4, offset = 0x4, fixed_abs, tag = 'smem constant byte address 0x4 - core index']
  #allocation1 [shape = 'u32[144,128]{1,0:T(1,128)}', space=vmem, size = 0x12000, scoped, tag = 'internal scratch']
  %s0 = inlined_call_operand.vmem [shape: f32[8,256], index: 0, kind: input, shape index: {}]
  %s1 = inlined_call_operand.vmem [shape: bf16[12,8], index: 1, kind: input, shape index: {}]
  %s2 = inlined_call_operand.vmem [shape: f32[12,1], index: 2, kind: input, shape index: {}]
  %s3 = inlined_call_operand.vmem [shape: bf16[8,12], index: 3, kind: input, shape index: {}]
  %s4 = inlined_call_operand.vmem [shape: f32[8,1], index: 4, kind: input, shape index: {}]
  %s5 = inlined_call_operand.hbm [shape: f32[9,8,256], index: 5, kind: input, shape index: {}]
  %s6 = inlined_call_operand.vmem [shape: f32[8,1], index: 6, kind: input, shape index: {}]
  %s7 = inlined_call_operand.hbm [shape: f32[25,8,256], index: 7, kind: input, shape index: {}]
  %s8 = inlined_call_operand.vmem [shape: f32[8,1], index: 8, kind: input, shape index: {}]
  %s9 = inlined_call_operand.vmem [shape: bf16[8,8], index: 9, kind: input, shape index: {}]
  %s10 = inlined_call_operand.vmem [shape: f32[8,1], index: 10, kind: input, shape index: {}]
  %s11 = inlined_call_operand.vmem [shape: bf16[12,8], index: 11, kind: input, shape index: {}]
  %s12 = inlined_call_operand.vmem [shape: f32[12,1], index: 12, kind: input, shape index: {}]
  %s13 = inlined_call_operand.vmem [shape: bf16[16,12], index: 13, kind: input, shape index: {}]
  %s14 = inlined_call_operand.vmem [shape: f32[16,1], index: 14, kind: input, shape index: {}]
  %s15 = inlined_call_operand.hbm [shape: f32[16,256], index: 15, kind: output, shape index: {}]
  %s16 = sld [smem:[#allocation0]]
  $region78: #{tpu_custom_call.1} parent=0
    _
  %s18 = ssub.s32 1, %s16
  %s19 = scalar_select 0, %s18, %s16
  $region1: #{tpu_custom_call.1} parent=0
    #allocation2 [shape = 'u8[73728]{0}', space=vmem, size = 0x12000, scoped, tag = 'input window, operand 5, single buffered']
    #allocation3 [shape = 's32[1]{0}', space=sflag, size = 0x4, scoped, tag = 'scoped memory for tpu_custom_call.1']
    #allocation4 [shape = 's32[1]{0}', space=sflag, size = 0x4, scoped, tag = 'scoped memory for tpu_custom_call.1']
    #allocation5 [shape = 'u8[204800]{0}', space=vmem, size = 0x32000, scoped, tag = 'input window, operand 7, single buffered']
    #allocation6 [shape = 's32[1]{0}', space=sflag, size = 0x4, scoped, tag = 'scoped memory for tpu_custom_call.1']
    #allocation7 [shape = 'u8[16384]{0}', space=vmem, size = 0x4000, scoped, tag = 'output window, operand 0, single buffered']
    %20 = vsyncpa [#allocation3], 0
    %21 = vsyncpa [#allocation6], 0
    %22 = vsyncpa [#allocation4], 0
    // Predicated region
    $region2: #{tpu_custom_call.1} parent=1 // pred_check
      _
    $region3: #{tpu_custom_call.1} parent=1 // pred_check_branch
      %24 = sbr.rel (0) target = $region5
    $region4: #{tpu_custom_call.1} parent=1 // pred_region
      _
    $region5: #{tpu_custom_call.1} parent=1 // pred_fallthru
      _
    // Predicated region
    $region6: #{tpu_custom_call.1} parent=1 // pred_check
      _
    $region7: #{tpu_custom_call.1} parent=1 // pred_check_branch
      %26 = sbr.rel (0) target = $region9
    $region8: #{tpu_custom_call.1} parent=1 // pred_region
      _
    $region9: #{tpu_custom_call.1} parent=1 // pred_fallthru
      _
    // Predicated region
    $region10: #{tpu_custom_call.1} parent=1 // pred_check
      _
    $region11: #{tpu_custom_call.1} parent=1 // pred_check_branch
      %28 = sbr.rel (0) target = $region13
    $region12: #{tpu_custom_call.1} parent=1 // pred_region
      _
    $region13: #{tpu_custom_call.1} parent=1 // pred_fallthru
      _
    // Predicated region
    $region14: #{tpu_custom_call.1} parent=1 // pred_check
      _
    $region15: #{tpu_custom_call.1} parent=1 // pred_check_branch
      %30 = sbr.rel (0) target = $region17
    $region16: #{tpu_custom_call.1} parent=1 // pred_region
      _
    $region17: #{tpu_custom_call.1} parent=1 // pred_fallthru
      _
    // Predicated region
    $region18: #{tpu_custom_call.1} parent=1 // pred_check
      _
    $region19: #{tpu_custom_call.1} parent=1 // pred_check_branch
      %32 = sbr.rel (0) target = $region21
    $region20: #{tpu_custom_call.1} parent=1 // pred_region
      _
    $region21: #{tpu_custom_call.1} parent=1 // pred_fallthru
      _
    // Predicated region
    $region22: #{tpu_custom_call.1} parent=1 // pred_check
      _
    $region23: #{tpu_custom_call.1} parent=1 // pred_check_branch
      %34 = sbr.rel (0) target = $region25
    $region24: #{tpu_custom_call.1} parent=1 // pred_region
      %s36 = ssub.s32 2304, 2304
      %37 = vsyncadd [#allocation3], %s36
      %s38 = sshll.u32 [#allocation2], 4
      %s39 = int_to_ptr.vmem [resolvable:$true] %s38
      %44 = dma.hbm_to_vmem [thread:$0]  %s5, 2304, %s39, [#allocation3], 256, 256, 16
    $region25: #{tpu_custom_call.1} parent=1 // pred_fallthru
      _
    // Predicated region
    $region26: #{tpu_custom_call.1} parent=1 // pred_check
      _
    $region27: #{tpu_custom_call.1} parent=1 // pred_check_branch
      %46 = sbr.rel (0) target = $region29
    $region28: #{tpu_custom_call.1} parent=1 // pred_region
      _
    $region29: #{tpu_custom_call.1} parent=1 // pred_fallthru
      _
    // Predicated region
    $region30: #{tpu_custom_call.1} parent=1 // pred_check
      _
    $region31: #{tpu_custom_call.1} parent=1 // pred_check_branch
      %48 = sbr.rel (0) target = $region33
    $region32: #{tpu_custom_call.1} parent=1 // pred_region
      %s50 = ssub.s32 6400, 6400
      %51 = vsyncadd [#allocation6], %s50
      %s52 = sshll.u32 [#allocation5], 4
      %s53 = int_to_ptr.vmem [resolvable:$true] %s52
      %58 = dma.hbm_to_vmem [thread:$0]  %s7, 6400, %s53, [#allocation6], 256, 256, 16
    $region33: #{tpu_custom_call.1} parent=1 // pred_fallthru
      _
    // Predicated region
    $region34: #{tpu_custom_call.1} parent=1 // pred_check
      _
    $region35: #{tpu_custom_call.1} parent=1 // pred_check_branch
      %60 = sbr.rel (0) target = $region37
    $region36: #{tpu_custom_call.1} parent=1 // pred_region
      _
    $region37: #{tpu_custom_call.1} parent=1 // pred_fallthru
      _
    // Predicated region
    $region38: #{tpu_custom_call.1} parent=1 // pred_check
      _
    $region39: #{tpu_custom_call.1} parent=1 // pred_check_branch
      %62 = sbr.rel (0) target = $region41
    $region40: #{tpu_custom_call.1} parent=1 // pred_region
      _
    $region41: #{tpu_custom_call.1} parent=1 // pred_fallthru
      _
    // Predicated region
    $region42: #{tpu_custom_call.1} parent=1 // pred_check
      _
    $region43: #{tpu_custom_call.1} parent=1 // pred_check_branch
      %64 = sbr.rel (0) target = $region45
    $region44: #{tpu_custom_call.1} parent=1 // pred_region
      _
    $region45: #{tpu_custom_call.1} parent=1 // pred_fallthru
      _
    // Predicated region
    $region46: #{tpu_custom_call.1} parent=1 // pred_check
      _
    $region47: #{tpu_custom_call.1} parent=1 // pred_check_branch
      %66 = sbr.rel (0) target = $region49
    $region48: #{tpu_custom_call.1} parent=1 // pred_region
      _
    $region49: #{tpu_custom_call.1} parent=1 // pred_fallthru
      _
    // Predicated region
    $region50: #{tpu_custom_call.1} parent=1 // pred_check
      _
    $region51: #{tpu_custom_call.1} parent=1 // pred_check_branch
      %68 = sbr.rel (0) target = $region53
    $region52: #{tpu_custom_call.1} parent=1 // pred_region
      _
    $region53: #{tpu_custom_call.1} parent=1 // pred_fallthru
      _
    // Predicated region
    $region54: #{tpu_custom_call.1} parent=1 // pred_check
      _
    $region55: #{tpu_custom_call.1} parent=1 // pred_check_branch
      %70 = sbr.rel (0) target = $region57
    $region56: #{tpu_custom_call.1} parent=1 // pred_region
      _
    $region57: #{tpu_custom_call.1} parent=1 // pred_fallthru
      _
    // Predicated region
    $region58: #{tpu_custom_call.1} parent=1 // pred_check
      _
    $region59: #{tpu_custom_call.1} parent=1 // pred_check_branch
      %72 = sbr.rel (0) target = $region61
    $region60: #{tpu_custom_call.1} parent=1 // pred_region
      _
    $region61: #{tpu_custom_call.1} parent=1 // pred_fallthru
      _
    // Predicated region
    $region62: #{tpu_custom_call.1} parent=1 // pred_check
      _
    $region63: #{tpu_custom_call.1} parent=1 // pred_check_branch
      %74 = sbr.rel (0) target = $region65
    $region64: #{tpu_custom_call.1} parent=1 // pred_region
      %75 = dma.done [#allocation3], 2304
    $region65: #{tpu_custom_call.1} parent=1 // pred_fallthru
      _
    // Predicated region
    $region66: #{tpu_custom_call.1} parent=1 // pred_check
      _
    $region67: #{tpu_custom_call.1} parent=1 // pred_check_branch
      %77 = sbr.rel (0) target = $region69
    $region68: #{tpu_custom_call.1} parent=1 // pred_region
      %78 = dma.done [#allocation6], 6400
    $region69: #{tpu_custom_call.1} parent=1 // pred_fallthru
      _
    %v80 = vld [vmem:[%s0] sm:$0xff]
    %v81 = vld [vmem:[%s0 + $0x8] sm:$0xff]
    %v82 = vld [vmem:[%s1] sm:$0xf]
    %v83 = vld [vmem:[%s1 + $0x4] sm:$0x3]
    %v84 = vpack.c.bf16 %v80, %v80
    %v85 = vpack.c.bf16 %v81, %v81
    %v86 = vld [vmem:[%s2] sm:$0xff]
    %v87 = vld [vmem:[%s2 + $0x8] sm:$0xf]
    %89 = vset.pattern.permute.xlu0 0
    %90 = vperm.xlu0 %89, %v86
    %v91 = vpop.permute.xlu0 %90
    %94 = vset.pattern.permute.xlu0 0
    %95 = vperm.xlu0 %94, %v87
    %v96 = vpop.permute.xlu0 %95
    %v100 = vunpack.c.l.b16 %v82
    %v101 = vunpack.c.l.b16 %v83
    %v102 = vpack.c.b16 %v101, %v100
    %vm103 = vcmask 64512
    %v105 = vsel %vm103, %v102, 0
    %vm107 = vcmask 1043456
    %v109 = vsel %vm107, %v84, 0
    %v112 = vsel %vm107, %v85, 0
    %114 = vmatprep.subr.bf16.mxu0 0
    %115 = vmatpush1.bf16.msra.mxu0 0
    %116 = vmatprep.subr.bf16.mxu0 0
    %117 = vmatpush1.bf16.msra.mxu0 0
    %118 = vmatprep.subr.bf16.mxu0 0
    %119 = vmatpush1.bf16.msra.mxu0 0
    %120 = vmatprep.subr.bf16.mxu0 0
    %121 = vmatpush1.bf16.msra.mxu0 0
    %122 = vmatprep.subr.bf16.mxu0 0
    %123 = vmatpush1.bf16.msra.mxu0 0
    %124 = vmatprep.subr.bf16.mxu0 0
    %125 = vmatpush1.bf16.msra.mxu0 0
    %126 = vmatprep.subr.bf16.mxu0 0
    %127 = vmatpush1.bf16.msra.mxu0 0
    %128 = vmatprep.subr.bf16.mxu0 %v112
    %129 = vmatpush1.bf16.msra.mxu0 %v109
    %130 = vmatprep.subr.bf16.mxu0 0
    %131 = vmatpush2.bf16.msra.mxu0 0
    %132 = vmatprep.subr.bf16.mxu0 0
    %133 = vmatpush2.bf16.msra.mxu0 0
    %134 = vmatprep.subr.bf16.mxu0 0
    %135 = vmatpush2.bf16.msra.mxu0 0
    %136 = vmatprep.subr.bf16.mxu0 0
    %137 = vmatpush2.bf16.msra.mxu0 0
    %138 = vmatprep.subr.bf16.mxu0 0
    %139 = vmatpush2.bf16.msra.mxu0 0
    %140 = vmatprep.subr.bf16.mxu0 0
    %141 = vmatpush2.bf16.msra.mxu0 0
    %142 = vmatprep.subr.bf16.mxu0 0
    %143 = vmatpush2.bf16.msra.mxu0 0
    %144 = vmatprep.subr.bf16.mxu0 0
    %145 = vmatpush2.bf16.msra.mxu0 0
    %146 = vmatprep.mubr.bf16.mxu0 0
    %147 = vmatmul.mubr.bf16.gmra.mxu0 %v105
    %v148 = vpop.f32.mrf.mxu0
    %v149 = vadd.f32 %v91, %v148
    %v150 = vpop.f32.mrf.mxu0
    %v151 = vadd.f32 %v91, %v150
    %v152 = vpop.f32.mrf.mxu0
    %v153 = vadd.f32 %v96, %v152
    %v154 = vpop.f32.mrf.mxu0
    %v155 = vadd.f32 %v96, %v154
    %156 = vdwg.mxu0
    %v157 = vmul.f32 %v149, 0.5
    %v158 = vmul.f32 %v151, 0.5
    %v159 = vmul.f32 %v153, 0.5
    %v160 = vmul.f32 %v155, 0.5
    %v161 = vmul.f32 %v149, 0.044715
    %v162 = vmul.f32 %v151, 0.044715
    %v163 = vmul.f32 %v153, 0.044715
    %v164 = vmul.f32 %v155, 0.044715
    %v165 = vmul.f32 %v161, %v149
    %v166 = vmul.f32 %v162, %v151
    %v167 = vmul.f32 %v163, %v153
    %v168 = vmul.f32 %v164, %v155
    %v169 = vmul.f32 %v165, %v149
    %v170 = vmul.f32 %v166, %v151
    %v171 = vmul.f32 %v167, %v153
    %v172 = vmul.f32 %v168, %v155
    %v173 = vadd.f32 %v149, %v169
    %v174 = vadd.f32 %v151, %v170
    %v175 = vadd.f32 %v153, %v171
    %v176 = vadd.f32 %v155, %v172
    %v177 = vmul.f32 %v173, 0.7978846
    %v178 = vmul.f32 %v174, 0.7978846
    %v179 = vmul.f32 %v175, 0.7978846
    %v180 = vmul.f32 %v176, 0.7978846
    %v181 = vtanh.pop %v177
    %v182 = vtanh.pop %v178
    %v183 = vtanh.pop %v179
    %v184 = vtanh.pop %v180
    %v185 = vadd.f32 %v181, 1.0
    %v186 = vadd.f32 %v182, 1.0
    %v187 = vadd.f32 %v183, 1.0
    %v188 = vadd.f32 %v184, 1.0
    %v189 = vmul.f32 %v157, %v185
    %v190 = vmul.f32 %v158, %v186
    %v191 = vmul.f32 %v159, %v187
    %v192 = vmul.f32 %v160, %v188
    %v193 = vld [vmem:[%s3] sm:$0xf]
    %v194 = vpack.c.bf16 %v191, %v189
    %v195 = vpack.c.bf16 %v192, %v190
    %v196 = vld [vmem:[%s4] sm:$0xff]
    %198 = vset.pattern.permute.xlu0 0
    %199 = vperm.xlu0 %198, %v196
    %v200 = vpop.permute.xlu0 %199
    %vm202 = vcmask 97280
    %v204 = vsel %vm202, %v193, 0
    %vm206 = vcmask 1045504
    %v208 = vsel %vm206, %v194, 0
    %v211 = vsel %vm206, %v195, 0
    %213 = vmatprep.subr.bf16.mxu0 0
    %214 = vmatpush1.bf16.msra.mxu0 0
    %215 = vmatprep.subr.bf16.mxu0 0
    %216 = vmatpush1.bf16.msra.mxu0 0
    %217 = vmatprep.subr.bf16.mxu0 0
    %218 = vmatpush1.bf16.msra.mxu0 0
    %219 = vmatprep.subr.bf16.mxu0 0
    %220 = vmatpush1.bf16.msra.mxu0 0
    %221 = vmatprep.subr.bf16.mxu0 0
    %222 = vmatpush1.bf16.msra.mxu0 0
    %223 = vmatprep.subr.bf16.mxu0 0
    %224 = vmatpush1.bf16.msra.mxu0 0
    %225 = vmatprep.subr.bf16.mxu0 0
    %226 = vmatpush1.bf16.msra.mxu0 0
    %227 = vmatprep.subr.bf16.mxu0 %v211
    %228 = vmatpush1.bf16.msra.mxu0 %v208
    %229 = vmatprep.subr.bf16.mxu0 0
    %230 = vmatpush2.bf16.msra.mxu0 0
    %231 = vmatprep.subr.bf16.mxu0 0
    %232 = vmatpush2.bf16.msra.mxu0 0
    %233 = vmatprep.subr.bf16.mxu0 0
    %234 = vmatpush2.bf16.msra.mxu0 0
    %235 = vmatprep.subr.bf16.mxu0 0
    %236 = vmatpush2.bf16.msra.mxu0 0
    %237 = vmatprep.subr.bf16.mxu0 0
    %238 = vmatpush2.bf16.msra.mxu0 0
    %239 = vmatprep.subr.bf16.mxu0 0
    %240 = vmatpush2.bf16.msra.mxu0 0
    %241 = vmatprep.subr.bf16.mxu0 0
    %242 = vmatpush2.bf16.msra.mxu0 0
    %243 = vmatprep.subr.bf16.mxu0 0
    %244 = vmatpush2.bf16.msra.mxu0 0
    %245 = vmatprep.mubr.bf16.mxu0 0
    %246 = vmatmul.mubr.bf16.gmra.mxu0 %v204
    %v247 = vpop.f32.mrf.mxu0
    %v248 = vadd.f32 %v200, %v247
    %v249 = vpop.f32.mrf.mxu0
    %v250 = vadd.f32 %v200, %v249
    %v251 = vpop.f32.mrf.mxu0
    %v252 = vpop.f32.mrf.mxu0
    %253 = vdwg.mxu0
    %v254 = vadd.f32 %v80, %v248
    %v255 = vadd.f32 %v81, %v250
    %v256 = vmul.f32 %v254, 0.5
    %v257 = vmul.f32 %v255, 0.5
    %v258 = vmul.f32 %v254, 0.044715
    %v259 = vmul.f32 %v255, 0.044715
    %v260 = vmul.f32 %v258, %v254
    %v261 = vmul.f32 %v259, %v255
    %v262 = vmul.f32 %v260, %v254
    %v263 = vmul.f32 %v261, %v255
    %v264 = vadd.f32 %v254, %v262
    %v265 = vadd.f32 %v255, %v263
    %v266 = vmul.f32 %v264, 0.7978846
    %v267 = vmul.f32 %v265, 0.7978846
    %v268 = vtanh.pop %v266
    %v269 = vtanh.pop %v267
    %v270 = vadd.f32 %v268, 1.0
    %v271 = vadd.f32 %v269, 1.0
    %v272 = vmul.f32 %v256, %v270
    %v273 = vmul.f32 %v257, %v271
    %274 = vrot.lane.b32.xlu0 %v272, 1
    %v275 = vpop.permute.xlu0 %274
    %276 = vrot.lane.b32.xlu0 %v273, 1
    %v277 = vpop.permute.xlu0 %276
    %v278 = vlaneseq
    %v279 = vand.u32 %v278, 127
    %vm280 = vcmp.lt.s32.totalorder %v279, 1
    %v281 = vsel %vm280, %v275, %v277
    %v282 = vsel %vm280, %v277, %v275
    %283 = vrot.lane.b32.xlu0 %v272, 127
    %v284 = vpop.permute.xlu0 %283
    %285 = vrot.lane.b32.xlu0 %v273, 127
    %v286 = vpop.permute.xlu0 %285
    %vm287 = vcmp.lt.s32.totalorder %v279, 127
    %v288 = vsel %vm287, %v284, %v286
    %v289 = vsel %vm287, %v286, %v284
    %v290 = vld [vmem:[%s6] sm:$0xff]
    %292 = vset.pattern.permute.xlu0 0
    %293 = vperm.xlu0 %292, %v290
    %v294 = vpop.permute.xlu0 %293
    %v296 = vld [vmem:[#allocation2] sm:$0xff]
    %v297 = vld [vmem:[#allocation2 + $0x8] sm:$0xff]
    %v298 = vmul.f32 %v296, %v282
    %v299 = vmul.f32 %v297, %v281
    %s300 = scalar_lea.vmem [#allocation2], 16
    %v301 = vld [vmem:[%s300] sm:$0xff]
    %v302 = vld [vmem:[%s300 + $0x8] sm:$0xff]
    %v303 = vmul.f32 %v301, %v272
    %v304 = vmul.f32 %v302, %v273
    %v305 = vadd.f32 %v298, %v303
    %v306 = vadd.f32 %v299, %v304
    %s307 = scalar_lea.vmem [#allocation2], 32
    %v308 = vld [vmem:[%s307] sm:$0xff]
    %v309 = vld [vmem:[%s307 + $0x8] sm:$0xff]
    %v310 = vmul.f32 %v308, %v288
    %v311 = vmul.f32 %v309, %v289
    %v312 = vadd.f32 %v305, %v310
    %v313 = vadd.f32 %v306, %v311
    %314 = vrot.lane.b32.xlu0 %v312, 16
    %v315 = vpop.permute.xlu0 %314
    %316 = vrot.lane.b32.xlu0 %v313, 16
    %v317 = vpop.permute.xlu0 %316
    %vm318 = vcmp.lt.s32.totalorder %v279, 16
    %v319 = vsel %vm318, %v315, %v317
    %v320 = vsel %vm318, %v317, %v315
    %v321 = vadd.f32 %v294, %v320
    %v322 = vadd.f32 %v294, %v319
    %s323 = scalar_lea.vmem [#allocation2], 48
    %v324 = vld [vmem:[%s323] sm:$0xff]
    %v325 = vld [vmem:[%s323 + $0x8] sm:$0xff]
    %v326 = vmul.f32 %v324, %v282
    %v327 = vmul.f32 %v325, %v281
    %s328 = scalar_lea.vmem [#allocation2], 64
    %v329 = vld [vmem:[%s328] sm:$0xff]
    %v330 = vld [vmem:[%s328 + $0x8] sm:$0xff]
    %v331 = vmul.f32 %v329, %v272
    %v332 = vmul.f32 %v330, %v273
    %v333 = vadd.f32 %v326, %v331
    %v334 = vadd.f32 %v327, %v332
    %s335 = scalar_lea.vmem [#allocation2], 80
    %v336 = vld [vmem:[%s335] sm:$0xff]
    %v337 = vld [vmem:[%s335 + $0x8] sm:$0xff]
    %v338 = vmul.f32 %v336, %v288
    %v339 = vmul.f32 %v337, %v289
    %v340 = vadd.f32 %v333, %v338
    %v341 = vadd.f32 %v334, %v339
    %v342 = vadd.f32 %v321, %v340
    %v343 = vadd.f32 %v322, %v341
    %s344 = scalar_lea.vmem [#allocation2], 96
    %v345 = vld [vmem:[%s344] sm:$0xff]
    %v346 = vld [vmem:[%s344 + $0x8] sm:$0xff]
    %v347 = vmul.f32 %v345, %v282
    %v348 = vmul.f32 %v346, %v281
    %s349 = scalar_lea.vmem [#allocation2], 112
    %v350 = vld [vmem:[%s349] sm:$0xff]
    %v351 = vld [vmem:[%s349 + $0x8] sm:$0xff]
    %v352 = vmul.f32 %v350, %v272
    %v353 = vmul.f32 %v351, %v273
    %v354 = vadd.f32 %v347, %v352
    %v355 = vadd.f32 %v348, %v353
    %s356 = scalar_lea.vmem [#allocation2], 128
    %v357 = vld [vmem:[%s356] sm:$0xff]
    %v358 = vld [vmem:[%s356 + $0x8] sm:$0xff]
    %v359 = vmul.f32 %v357, %v288
    %v360 = vmul.f32 %v358, %v289
    %v361 = vadd.f32 %v354, %v359
    %v362 = vadd.f32 %v355, %v360
    %363 = vrot.lane.b32.xlu0 %v361, 112
    %v364 = vpop.permute.xlu0 %363
    %365 = vrot.lane.b32.xlu0 %v362, 112
    %v366 = vpop.permute.xlu0 %365
    %vm367 = vcmp.lt.s32.totalorder %v279, 112
    %v368 = vsel %vm367, %v364, %v366
    %v369 = vsel %vm367, %v366, %v364
    %v370 = vadd.f32 %v342, %v368
    %v371 = vadd.f32 %v343, %v369
    %v372 = vadd.f32 %v272, %v370
    %v373 = vadd.f32 %v273, %v371
    %v374 = vmul.f32 %v372, 0.5
    %v375 = vmul.f32 %v373, 0.5
    %v376 = vmul.f32 %v372, 0.044715
    %v377 = vmul.f32 %v373, 0.044715
    %v378 = vmul.f32 %v376, %v372
    %v379 = vmul.f32 %v377, %v373
    %v380 = vmul.f32 %v378, %v372
    %v381 = vmul.f32 %v379, %v373
    %v382 = vadd.f32 %v372, %v380
    %v383 = vadd.f32 %v373, %v381
    %v384 = vmul.f32 %v382, 0.7978846
    %v385 = vmul.f32 %v383, 0.7978846
    %v386 = vtanh.pop %v384
    %v387 = vtanh.pop %v385
    %v388 = vadd.f32 %v386, 1.0
    %v389 = vadd.f32 %v387, 1.0
    %v390 = vmul.f32 %v374, %v388
    %v391 = vmul.f32 %v375, %v389
    %392 = vrot.lane.b32.xlu0 %v390, 2
    %v393 = vpop.permute.xlu0 %392
    %394 = vrot.lane.b32.xlu0 %v391, 2
    %v395 = vpop.permute.xlu0 %394
    %vm396 = vcmp.lt.s32.totalorder %v279, 2
    %v397 = vsel %vm396, %v393, %v395
    %v398 = vsel %vm396, %v395, %v393
    %399 = vrot.lane.b32.xlu0 %v390, 1
    %v400 = vpop.permute.xlu0 %399
    %401 = vrot.lane.b32.xlu0 %v391, 1
    %v402 = vpop.permute.xlu0 %401
    %v403 = vsel %vm280, %v400, %v402
    %v404 = vsel %vm280, %v402, %v400
    %405 = vrot.lane.b32.xlu0 %v390, 127
    %v406 = vpop.permute.xlu0 %405
    %407 = vrot.lane.b32.xlu0 %v391, 127
    %v408 = vpop.permute.xlu0 %407
    %v409 = vsel %vm287, %v406, %v408
    %v410 = vsel %vm287, %v408, %v406
    %411 = vrot.lane.b32.xlu0 %v390, 126
    %v412 = vpop.permute.xlu0 %411
    %413 = vrot.lane.b32.xlu0 %v391, 126
    %v414 = vpop.permute.xlu0 %413
    %vm415 = vcmp.lt.s32.totalorder %v279, 126
    %v416 = vsel %vm415, %v412, %v414
    %v417 = vsel %vm415, %v414, %v412
    %v418 = vld [vmem:[%s8] sm:$0xff]
    %420 = vset.pattern.permute.xlu0 0
    %421 = vperm.xlu0 %420, %v418
    %v422 = vpop.permute.xlu0 %421
    %v424 = vld [vmem:[#allocation5] sm:$0xff]
    %v425 = vld [vmem:[#allocation5 + $0x8] sm:$0xff]
    %v426 = vmul.f32 %v424, %v398
    %v427 = vmul.f32 %v425, %v397
    %s428 = scalar_lea.vmem [#allocation5], 16
    %v429 = vld [vmem:[%s428] sm:$0xff]
    %v430 = vld [vmem:[%s428 + $0x8] sm:$0xff]
    %v431 = vmul.f32 %v429, %v404
    %v432 = vmul.f32 %v430, %v403
    %v433 = vadd.f32 %v426, %v431
    %v434 = vadd.f32 %v427, %v432
    %s435 = scalar_lea.vmem [#allocation5], 32
    %v436 = vld [vmem:[%s435] sm:$0xff]
    %v437 = vld [vmem:[%s435 + $0x8] sm:$0xff]
    %v438 = vmul.f32 %v436, %v390
    %v439 = vmul.f32 %v437, %v391
    %v440 = vadd.f32 %v433, %v438
    %v441 = vadd.f32 %v434, %v439
    %s442 = scalar_lea.vmem [#allocation5], 48
    %v443 = vld [vmem:[%s442] sm:$0xff]
    %v444 = vld [vmem:[%s442 + $0x8] sm:$0xff]
    %v445 = vmul.f32 %v443, %v409
    %v446 = vmul.f32 %v444, %v410
    %v447 = vadd.f32 %v440, %v445
    %v448 = vadd.f32 %v441, %v446
    %s449 = scalar_lea.vmem [#allocation5], 64
    %v450 = vld [vmem:[%s449] sm:$0xff]
    %v451 = vld [vmem:[%s449 + $0x8] sm:$0xff]
    %v452 = vmul.f32 %v450, %v416
    %v453 = vmul.f32 %v451, %v417
    %v454 = vadd.f32 %v447, %v452
    %v455 = vadd.f32 %v448, %v453
    %456 = vrot.lane.b32.xlu0 %v454, 32
    %v457 = vpop.permute.xlu0 %456
    %458 = vrot.lane.b32.xlu0 %v455, 32
    %v459 = vpop.permute.xlu0 %458
    %vm460 = vcmp.lt.s32.totalorder %v279, 32
    %v461 = vsel %vm460, %v457, %v459
    %v462 = vsel %vm460, %v459, %v457
    %v463 = vadd.f32 %v422, %v462
    %v464 = vadd.f32 %v422, %v461
    %s465 = scalar_lea.vmem [#allocation5], 80
    %v466 = vld [vmem:[%s465] sm:$0xff]
    %v467 = vld [vmem:[%s465 + $0x8] sm:$0xff]
    %v468 = vmul.f32 %v466, %v398
    %v469 = vmul.f32 %v467, %v397
    %s470 = scalar_lea.vmem [#allocation5], 96
    %v471 = vld [vmem:[%s470] sm:$0xff]
    %v472 = vld [vmem:[%s470 + $0x8] sm:$0xff]
    %v473 = vmul.f32 %v471, %v404
    %v474 = vmul.f32 %v472, %v403
    %v475 = vadd.f32 %v468, %v473
    %v476 = vadd.f32 %v469, %v474
    %s477 = scalar_lea.vmem [#allocation5], 112
    %v478 = vld [vmem:[%s477] sm:$0xff]
    %v479 = vld [vmem:[%s477 + $0x8] sm:$0xff]
    %v480 = vmul.f32 %v478, %v390
    %v481 = vmul.f32 %v479, %v391
    %v482 = vadd.f32 %v475, %v480
    %v483 = vadd.f32 %v476, %v481
    %s484 = scalar_lea.vmem [#allocation5], 128
    %v485 = vld [vmem:[%s484] sm:$0xff]
    %v486 = vld [vmem:[%s484 + $0x8] sm:$0xff]
    %v487 = vmul.f32 %v485, %v409
    %v488 = vmul.f32 %v486, %v410
    %v489 = vadd.f32 %v482, %v487
    %v490 = vadd.f32 %v483, %v488
    %s491 = scalar_lea.vmem [#allocation5], 144
    %v492 = vld [vmem:[%s491] sm:$0xff]
    %v493 = vld [vmem:[%s491 + $0x8] sm:$0xff]
    %v494 = vmul.f32 %v492, %v416
    %v495 = vmul.f32 %v493, %v417
    %v496 = vadd.f32 %v489, %v494
    %v497 = vadd.f32 %v490, %v495
    %498 = vrot.lane.b32.xlu0 %v496, 16
    %v499 = vpop.permute.xlu0 %498
    %500 = vrot.lane.b32.xlu0 %v497, 16
    %v501 = vpop.permute.xlu0 %500
    %v502 = vsel %vm318, %v499, %v501
    %v503 = vsel %vm318, %v501, %v499
    %v504 = vadd.f32 %v463, %v503
    %v505 = vadd.f32 %v464, %v502
    %s506 = scalar_lea.vmem [#allocation5], 160
    %v507 = vld [vmem:[%s506] sm:$0xff]
    %v508 = vld [vmem:[%s506 + $0x8] sm:$0xff]
    %v509 = vmul.f32 %v507, %v398
    %v510 = vmul.f32 %v508, %v397
    %s511 = scalar_lea.vmem [#allocation5], 176
    %v512 = vld [vmem:[%s511] sm:$0xff]
    %v513 = vld [vmem:[%s511 + $0x8] sm:$0xff]
    %v514 = vmul.f32 %v512, %v404
    %v515 = vmul.f32 %v513, %v403
    %v516 = vadd.f32 %v509, %v514
    %v517 = vadd.f32 %v510, %v515
    %s518 = scalar_lea.vmem [#allocation5], 192
    %v519 = vld [vmem:[%s518] sm:$0xff]
    %v520 = vld [vmem:[%s518 + $0x8] sm:$0xff]
    %v521 = vmul.f32 %v519, %v390
    %v522 = vmul.f32 %v520, %v391
    %v523 = vadd.f32 %v516, %v521
    %v524 = vadd.f32 %v517, %v522
    %s525 = scalar_lea.vmem [#allocation5], 208
    %v526 = vld [vmem:[%s525] sm:$0xff]
    %v527 = vld [vmem:[%s525 + $0x8] sm:$0xff]
    %v528 = vmul.f32 %v526, %v409
    %v529 = vmul.f32 %v527, %v410
    %v530 = vadd.f32 %v523, %v528
    %v531 = vadd.f32 %v524, %v529
    %s532 = scalar_lea.vmem [#allocation5], 224
    %v533 = vld [vmem:[%s532] sm:$0xff]
    %v534 = vld [vmem:[%s532 + $0x8] sm:$0xff]
    %v535 = vmul.f32 %v533, %v416
    %v536 = vmul.f32 %v534, %v417
    %v537 = vadd.f32 %v530, %v535
    %v538 = vadd.f32 %v531, %v536
    %v539 = vadd.f32 %v504, %v537
    %v540 = vadd.f32 %v505, %v538
    %s541 = scalar_lea.vmem [#allocation5], 240
    %v542 = vld [vmem:[%s541] sm:$0xff]
    %v543 = vld [vmem:[%s541 + $0x8] sm:$0xff]
    %v544 = vmul.f32 %v542, %v398
    %v545 = vmul.f32 %v543, %v397
    %s546 = scalar_lea.vmem [#allocation5], 256
    %v547 = vld [vmem:[%s546] sm:$0xff]
    %v548 = vld [vmem:[%s546 + $0x8] sm:$0xff]
    %v549 = vmul.f32 %v547, %v404
    %v550 = vmul.f32 %v548, %v403
    %v551 = vadd.f32 %v544, %v549
    %v552 = vadd.f32 %v545, %v550
    %s553 = scalar_lea.vmem [#allocation5], 272
    %v554 = vld [vmem:[%s553] sm:$0xff]
    %v555 = vld [vmem:[%s553 + $0x8] sm:$0xff]
    %v556 = vmul.f32 %v554, %v390
    %v557 = vmul.f32 %v555, %v391
    %v558 = vadd.f32 %v551, %v556
    %v559 = vadd.f32 %v552, %v557
    %s560 = scalar_lea.vmem [#allocation5], 288
    %v561 = vld [vmem:[%s560] sm:$0xff]
    %v562 = vld [vmem:[%s560 + $0x8] sm:$0xff]
    %v563 = vmul.f32 %v561, %v409
    %v564 = vmul.f32 %v562, %v410
    %v565 = vadd.f32 %v558, %v563
    %v566 = vadd.f32 %v559, %v564
    %s567 = scalar_lea.vmem [#allocation5], 304
    %v568 = vld [vmem:[%s567] sm:$0xff]
    %v569 = vld [vmem:[%s567 + $0x8] sm:$0xff]
    %v570 = vmul.f32 %v568, %v416
    %v571 = vmul.f32 %v569, %v417
    %v572 = vadd.f32 %v565, %v570
    %v573 = vadd.f32 %v566, %v571
    %574 = vrot.lane.b32.xlu0 %v572, 112
    %v575 = vpop.permute.xlu0 %574
    %576 = vrot.lane.b32.xlu0 %v573, 112
    %v577 = vpop.permute.xlu0 %576
    %v578 = vsel %vm367, %v575, %v577
    %v579 = vsel %vm367, %v577, %v575
    %v580 = vadd.f32 %v539, %v578
    %v581 = vadd.f32 %v540, %v579
    %s582 = scalar_lea.vmem [#allocation5], 320
    %v583 = vld [vmem:[%s582] sm:$0xff]
    %v584 = vld [vmem:[%s582 + $0x8] sm:$0xff]
    %v585 = vmul.f32 %v583, %v398
    %v586 = vmul.f32 %v584, %v397
    %s587 = scalar_lea.vmem [#allocation5], 336
    %v588 = vld [vmem:[%s587] sm:$0xff]
    %v589 = vld [vmem:[%s587 + $0x8] sm:$0xff]
    %v590 = vmul.f32 %v588, %v404
    %v591 = vmul.f32 %v589, %v403
    %v592 = vadd.f32 %v585, %v590
    %v593 = vadd.f32 %v586, %v591
    %s594 = scalar_lea.vmem [#allocation5], 352
    %v595 = vld [vmem:[%s594] sm:$0xff]
    %v596 = vld [vmem:[%s594 + $0x8] sm:$0xff]
    %v597 = vmul.f32 %v595, %v390
    %v598 = vmul.f32 %v596, %v391
    %v599 = vadd.f32 %v592, %v597
    %v600 = vadd.f32 %v593, %v598
    %s601 = scalar_lea.vmem [#allocation5], 368
    %v602 = vld [vmem:[%s601] sm:$0xff]
    %v603 = vld [vmem:[%s601 + $0x8] sm:$0xff]
    %v604 = vmul.f32 %v602, %v409
    %v605 = vmul.f32 %v603, %v410
    %v606 = vadd.f32 %v599, %v604
    %v607 = vadd.f32 %v600, %v605
    %s608 = scalar_lea.vmem [#allocation5], 384
    %v609 = vld [vmem:[%s608] sm:$0xff]
    %v610 = vld [vmem:[%s608 + $0x8] sm:$0xff]
    %v611 = vmul.f32 %v609, %v416
    %v612 = vmul.f32 %v610, %v417
    %v613 = vadd.f32 %v606, %v611
    %v614 = vadd.f32 %v607, %v612
    %615 = vrot.lane.b32.xlu0 %v613, 96
    %v616 = vpop.permute.xlu0 %615
    %617 = vrot.lane.b32.xlu0 %v614, 96
    %v618 = vpop.permute.xlu0 %617
    %vm619 = vcmp.lt.s32.totalorder %v279, 96
    %v620 = vsel %vm619, %v616, %v618
    %v621 = vsel %vm619, %v618, %v616
    %v622 = vadd.f32 %v580, %v620
    %v623 = vadd.f32 %v581, %v621
    %v624 = vadd.f32 %v390, %v622
    %v625 = vadd.f32 %v391, %v623
    %v626 = vmul.f32 %v624, 0.5
    %v627 = vmul.f32 %v625, 0.5
    %v628 = vmul.f32 %v624, 0.044715
    %v629 = vmul.f32 %v625, 0.044715
    %v630 = vmul.f32 %v628, %v624
    %v631 = vmul.f32 %v629, %v625
    %v632 = vmul.f32 %v630, %v624
    %v633 = vmul.f32 %v631, %v625
    %v634 = vadd.f32 %v624, %v632
    %v635 = vadd.f32 %v625, %v633
    %v636 = vmul.f32 %v634, 0.7978846
    %v637 = vmul.f32 %v635, 0.7978846
    %v638 = vtanh.pop %v636
    %v639 = vtanh.pop %v637
    %v640 = vadd.f32 %v638, 1.0
    %v641 = vadd.f32 %v639, 1.0
    %v642 = vmul.f32 %v626, %v640
    %v643 = vmul.f32 %v627, %v641
    %v644 = vld [vmem:[%s9] sm:$0xf]
    %v645 = vpack.c.bf16 %v642, %v642
    %v646 = vpack.c.bf16 %v643, %v643
    %v647 = vld [vmem:[%s10] sm:$0xff]
    %649 = vset.pattern.permute.xlu0 0
    %650 = vperm.xlu0 %649, %v647
    %v651 = vpop.permute.xlu0 %650
    %v654 = vsel %vm103, %v644, 0
    %v657 = vsel %vm107, %v645, 0
    %v660 = vsel %vm107, %v646, 0
    %662 = vmatprep.subr.bf16.mxu0 0
    %663 = vmatpush1.bf16.msra.mxu0 0
    %664 = vmatprep.subr.bf16.mxu0 0
    %665 = vmatpush1.bf16.msra.mxu0 0
    %666 = vmatprep.subr.bf16.mxu0 0
    %667 = vmatpush1.bf16.msra.mxu0 0
    %668 = vmatprep.subr.bf16.mxu0 0
    %669 = vmatpush1.bf16.msra.mxu0 0
    %670 = vmatprep.subr.bf16.mxu0 0
    %671 = vmatpush1.bf16.msra.mxu0 0
    %672 = vmatprep.subr.bf16.mxu0 0
    %673 = vmatpush1.bf16.msra.mxu0 0
    %674 = vmatprep.subr.bf16.mxu0 0
    %675 = vmatpush1.bf16.msra.mxu0 0
    %676 = vmatprep.subr.bf16.mxu0 %v660
    %677 = vmatpush1.bf16.msra.mxu0 %v657
    %678 = vmatprep.subr.bf16.mxu0 0
    %679 = vmatpush2.bf16.msra.mxu0 0
    %680 = vmatprep.subr.bf16.mxu0 0
    %681 = vmatpush2.bf16.msra.mxu0 0
    %682 = vmatprep.subr.bf16.mxu0 0
    %683 = vmatpush2.bf16.msra.mxu0 0
    %684 = vmatprep.subr.bf16.mxu0 0
    %685 = vmatpush2.bf16.msra.mxu0 0
    %686 = vmatprep.subr.bf16.mxu0 0
    %687 = vmatpush2.bf16.msra.mxu0 0
    %688 = vmatprep.subr.bf16.mxu0 0
    %689 = vmatpush2.bf16.msra.mxu0 0
    %690 = vmatprep.subr.bf16.mxu0 0
    %691 = vmatpush2.bf16.msra.mxu0 0
    %692 = vmatprep.subr.bf16.mxu0 0
    %693 = vmatpush2.bf16.msra.mxu0 0
    %694 = vmatprep.mubr.bf16.mxu0 0
    %695 = vmatmul.mubr.bf16.gmra.mxu0 %v654
    %v696 = vpop.f32.mrf.mxu0
    %v697 = vadd.f32 %v651, %v696
    %v698 = vpop.f32.mrf.mxu0
    %v699 = vadd.f32 %v651, %v698
    %v700 = vpop.f32.mrf.mxu0
    %v701 = vpop.f32.mrf.mxu0
    %702 = vdwg.mxu0
    %v703 = vadd.f32 %v642, %v697
    %v704 = vadd.f32 %v643, %v699
    %v705 = vmul.f32 %v703, 0.5
    %v706 = vmul.f32 %v704, 0.5
    %v707 = vmul.f32 %v703, 0.044715
    %v708 = vmul.f32 %v704, 0.044715
    %v709 = vmul.f32 %v707, %v703
    %v710 = vmul.f32 %v708, %v704
    %v711 = vmul.f32 %v709, %v703
    %v712 = vmul.f32 %v710, %v704
    %v713 = vadd.f32 %v703, %v711
    %v714 = vadd.f32 %v704, %v712
    %v715 = vmul.f32 %v713, 0.7978846
    %v716 = vmul.f32 %v714, 0.7978846
    %v717 = vtanh.pop %v715
    %v718 = vtanh.pop %v716
    %v719 = vadd.f32 %v717, 1.0
    %v720 = vadd.f32 %v718, 1.0
    %v721 = vmul.f32 %v705, %v719
    %v722 = vmul.f32 %v706, %v720
    %v723 = vld [vmem:[%s11] sm:$0xf]
    %v724 = vld [vmem:[%s11 + $0x4] sm:$0x3]
    %v725 = vpack.c.bf16 %v721, %v721
    %v726 = vpack.c.bf16 %v722, %v722
    %v727 = vld [vmem:[%s12] sm:$0xff]
    %v728 = vld [vmem:[%s12 + $0x8] sm:$0xf]
    %730 = vset.pattern.permute.xlu0 0
    %731 = vperm.xlu0 %730, %v727
    %v732 = vpop.permute.xlu0 %731
    %735 = vset.pattern.permute.xlu0 0
    %736 = vperm.xlu0 %735, %v728
    %v737 = vpop.permute.xlu0 %736
    %v741 = vunpack.c.l.b16 %v723
    %v742 = vunpack.c.l.b16 %v724
    %v743 = vpack.c.b16 %v742, %v741
    %v745 = vsel %vm103, %v743, 0
    %v748 = vsel %vm107, %v725, 0
    %v751 = vsel %vm107, %v726, 0
    %753 = vmatprep.subr.bf16.mxu0 0
    %754 = vmatpush1.bf16.msra.mxu0 0
    %755 = vmatprep.subr.bf16.mxu0 0
    %756 = vmatpush1.bf16.msra.mxu0 0
    %757 = vmatprep.subr.bf16.mxu0 0
    %758 = vmatpush1.bf16.msra.mxu0 0
    %759 = vmatprep.subr.bf16.mxu0 0
    %760 = vmatpush1.bf16.msra.mxu0 0
    %761 = vmatprep.subr.bf16.mxu0 0
    %762 = vmatpush1.bf16.msra.mxu0 0
    %763 = vmatprep.subr.bf16.mxu0 0
    %764 = vmatpush1.bf16.msra.mxu0 0
    %765 = vmatprep.subr.bf16.mxu0 0
    %766 = vmatpush1.bf16.msra.mxu0 0
    %767 = vmatprep.subr.bf16.mxu0 %v751
    %768 = vmatpush1.bf16.msra.mxu0 %v748
    %769 = vmatprep.subr.bf16.mxu0 0
    %770 = vmatpush2.bf16.msra.mxu0 0
    %771 = vmatprep.subr.bf16.mxu0 0
    %772 = vmatpush2.bf16.msra.mxu0 0
    %773 = vmatprep.subr.bf16.mxu0 0
    %774 = vmatpush2.bf16.msra.mxu0 0
    %775 = vmatprep.subr.bf16.mxu0 0
    %776 = vmatpush2.bf16.msra.mxu0 0
    %777 = vmatprep.subr.bf16.mxu0 0
    %778 = vmatpush2.bf16.msra.mxu0 0
    %779 = vmatprep.subr.bf16.mxu0 0
    %780 = vmatpush2.bf16.msra.mxu0 0
    %781 = vmatprep.subr.bf16.mxu0 0
    %782 = vmatpush2.bf16.msra.mxu0 0
    %783 = vmatprep.subr.bf16.mxu0 0
    %784 = vmatpush2.bf16.msra.mxu0 0
    %785 = vmatprep.mubr.bf16.mxu0 0
    %786 = vmatmul.mubr.bf16.gmra.mxu0 %v745
    %v787 = vpop.f32.mrf.mxu0
    %v788 = vadd.f32 %v732, %v787
    %v789 = vpop.f32.mrf.mxu0
    %v790 = vadd.f32 %v732, %v789
    %v791 = vpop.f32.mrf.mxu0
    %v792 = vadd.f32 %v737, %v791
    %v793 = vpop.f32.mrf.mxu0
    %v794 = vadd.f32 %v737, %v793
    %795 = vdwg.mxu0
    %v796 = vmul.f32 %v788, 0.5
    %v797 = vmul.f32 %v790, 0.5
    %v798 = vmul.f32 %v792, 0.5
    %v799 = vmul.f32 %v794, 0.5
    %v800 = vmul.f32 %v788, 0.044715
    %v801 = vmul.f32 %v790, 0.044715
    %v802 = vmul.f32 %v792, 0.044715
    %v803 = vmul.f32 %v794, 0.044715
    %v804 = vmul.f32 %v800, %v788
    %v805 = vmul.f32 %v801, %v790
    %v806 = vmul.f32 %v802, %v792
    %v807 = vmul.f32 %v803, %v794
    %v808 = vmul.f32 %v804, %v788
    %v809 = vmul.f32 %v805, %v790
    %v810 = vmul.f32 %v806, %v792
    %v811 = vmul.f32 %v807, %v794
    %v812 = vadd.f32 %v788, %v808
    %v813 = vadd.f32 %v790, %v809
    %v814 = vadd.f32 %v792, %v810
    %v815 = vadd.f32 %v794, %v811
    %v816 = vmul.f32 %v812, 0.7978846
    %v817 = vmul.f32 %v813, 0.7978846
    %v818 = vmul.f32 %v814, 0.7978846
    %v819 = vmul.f32 %v815, 0.7978846
    %v820 = vtanh.pop %v816
    %v821 = vtanh.pop %v817
    %v822 = vtanh.pop %v818
    %v823 = vtanh.pop %v819
    %v824 = vadd.f32 %v820, 1.0
    %v825 = vadd.f32 %v821, 1.0
    %v826 = vadd.f32 %v822, 1.0
    %v827 = vadd.f32 %v823, 1.0
    %v828 = vmul.f32 %v796, %v824
    %v829 = vmul.f32 %v797, %v825
    %v830 = vmul.f32 %v798, %v826
    %v831 = vmul.f32 %v799, %v827
    %v832 = vld [vmem:[%s13] sm:$0xf]
    %v833 = vld [vmem:[%s13 + $0x4] sm:$0xf]
    %v834 = vpack.c.bf16 %v830, %v828
    %v835 = vpack.c.bf16 %v831, %v829
    %v836 = vld [vmem:[%s14] sm:$0xff]
    %v837 = vld [vmem:[%s14 + $0x8] sm:$0xff]
    %839 = vset.pattern.permute.xlu0 0
    %840 = vperm.xlu0 %839, %v836
    %v841 = vpop.permute.xlu0 %840
    %844 = vset.pattern.permute.xlu0 0
    %845 = vperm.xlu0 %844, %v837
    %v846 = vpop.permute.xlu0 %845
    %v850 = vunpack.c.l.b16 %v832
    %v851 = vunpack.c.l.b16 %v833
    %v852 = vpack.c.b16 %v851, %v850
    %v854 = vsel %vm202, %v852, 0
    %v857 = vsel %vm206, %v834, 0
    %v860 = vsel %vm206, %v835, 0
    %862 = vmatprep.subr.bf16.mxu0 0
    %863 = vmatpush1.bf16.msra.mxu0 0
    %864 = vmatprep.subr.bf16.mxu0 0
    %865 = vmatpush1.bf16.msra.mxu0 0
    %866 = vmatprep.subr.bf16.mxu0 0
    %867 = vmatpush1.bf16.msra.mxu0 0
    %868 = vmatprep.subr.bf16.mxu0 0
    %869 = vmatpush1.bf16.msra.mxu0 0
    %870 = vmatprep.subr.bf16.mxu0 0
    %871 = vmatpush1.bf16.msra.mxu0 0
    %872 = vmatprep.subr.bf16.mxu0 0
    %873 = vmatpush1.bf16.msra.mxu0 0
    %874 = vmatprep.subr.bf16.mxu0 0
    %875 = vmatpush1.bf16.msra.mxu0 0
    %876 = vmatprep.subr.bf16.mxu0 %v860
    %877 = vmatpush1.bf16.msra.mxu0 %v857
    %878 = vmatprep.subr.bf16.mxu0 0
    %879 = vmatpush2.bf16.msra.mxu0 0
    %880 = vmatprep.subr.bf16.mxu0 0
    %881 = vmatpush2.bf16.msra.mxu0 0
    %882 = vmatprep.subr.bf16.mxu0 0
    %883 = vmatpush2.bf16.msra.mxu0 0
    %884 = vmatprep.subr.bf16.mxu0 0
    %885 = vmatpush2.bf16.msra.mxu0 0
    %886 = vmatprep.subr.bf16.mxu0 0
    %887 = vmatpush2.bf16.msra.mxu0 0
    %888 = vmatprep.subr.bf16.mxu0 0
    %889 = vmatpush2.bf16.msra.mxu0 0
    %890 = vmatprep.subr.bf16.mxu0 0
    %891 = vmatpush2.bf16.msra.mxu0 0
    %892 = vmatprep.subr.bf16.mxu0 0
    %893 = vmatpush2.bf16.msra.mxu0 0
    %894 = vmatprep.mubr.bf16.mxu0 0
    %895 = vmatmul.mubr.bf16.gmra.mxu0 %v854
    %v896 = vpop.f32.mrf.mxu0
    %v897 = vadd.f32 %v841, %v896
    %v898 = vpop.f32.mrf.mxu0
    %v899 = vadd.f32 %v841, %v898
    %v900 = vpop.f32.mrf.mxu0
    %v901 = vadd.f32 %v846, %v900
    %v902 = vpop.f32.mrf.mxu0
    %v903 = vadd.f32 %v846, %v902
    %904 = vdwg.mxu0
    %905 = vst [vmem:[#allocation7] sm:$0xff] %v897
    %906 = vst [vmem:[#allocation7 + $0x8] sm:$0xff] %v899
    %907 = vst [vmem:[#allocation7 + $0x10] sm:$0xff] %v901
    %908 = vst [vmem:[#allocation7 + $0x18] sm:$0xff] %v903
    // Predicated region
    $region70: #{tpu_custom_call.1} parent=1 // pred_check
      _
    $region71: #{tpu_custom_call.1} parent=1 // pred_check_branch
      %910 = sbr.rel (0) target = $region73
    $region72: #{tpu_custom_call.1} parent=1 // pred_region
      %s912 = ssub.s32 512, 512
      %913 = vsyncadd [#allocation4], %s912
      %s914 = sshll.u32 [#allocation7], 4
      %s915 = int_to_ptr.vmem [resolvable:$true] %s914
      %920 = dma.vmem_to_hbm [thread:$0]  %s915, 512, %s15, [#allocation4], 256, 256, 16
    $region73: #{tpu_custom_call.1} parent=1 // pred_fallthru
      _
    // Predicated region
    $region74: #{tpu_custom_call.1} parent=1 // pred_check
      _
    $region75: #{tpu_custom_call.1} parent=1 // pred_check_branch
      %922 = sbr.rel (0) target = $region77
    $region76: #{tpu_custom_call.1} parent=1 // pred_region
      %923 = dma.done [#allocation4], 512
    $region77: #{tpu_custom_call.1} parent=1 // pred_fallthru
      _
    %924 = vsyncpa [#allocation3], 1
    %925 = vsyncpa [#allocation6], 1
    %926 = vsyncpa [#allocation4], 1

</llo_original>
